<compile_context>
chip_gen: v7x
topology: tpu7x:2x2x1
jax: 0.10.0
libtpu: 0.0.40
codegen_flags: <defaults>
</compile_context>

<pallas_src>
import numpy as np

import jax
import jax.numpy as jnp
from jax.experimental import pallas as pl
from jax.experimental.pallas import tpu as pltpu


_BN_EPS = 1e-5
_LRELU_SLOPE = 0.2  # the module explicitly uses nn.LeakyReLU(0.2)


# ----------------------------- fused Pallas kernel -----------------------------

def _make_discriminator_kernel(n, meta):
    """Builds the fused forward kernel.

    Ref order: [x, (bmat, tnorm, gamma_t, beta_t) * L, wp, fc_b, out,
                scratch_act_1, ..., scratch_act_{L-1}]
    `meta` is a list of static per-layer dicts: h_in, h_out, stride, l_out, inv_m.
    """
    num_layers = len(meta)

    def kernel(*refs):
        x_ref = refs[0]
        wp_ref = refs[1 + 4 * num_layers]
        fcb_ref = refs[2 + 4 * num_layers]
        o_ref = refs[3 + 4 * num_layers]
        scratch = refs[4 + 4 * num_layers:]

        in_ref = x_ref            # (N*H_in, W_in*C_in) activation of current layer
        acts = None
        for li, m in enumerate(meta):
            bm_ref, t_ref, g_ref, be_ref = refs[1 + 4 * li: 5 + 4 * li]
            h_in, h_out, s = m["h_in"], m["h_out"], m["stride"]

            # --- Conv2d(k=3, pad=0, stride s): ONE MXU matmul per batch elem ---
            # operand[ho, kh*L_in + j] = A[n*H_in + kh + s*ho, j]; bmat is the
            # kh-stacked (3*L_in, L_out) weight matrix (kw/Cin/stride folded in).
            ys = []
            for b in range(n):
                base = b * h_in
                parts = []
                for kh in range(3):
                    if s == 1:
                        parts.append(in_ref[base + kh: base + kh + h_out, :])
                    else:
                        parts.append(in_ref[pl.ds(base + kh, h_out, stride=s), :])
                op = jnp.concatenate(parts, axis=-1).astype(jnp.bfloat16)
                ys.append(jnp.dot(op, bm_ref[...],
                                  preferred_element_type=jnp.float32))

            # --- BatchNorm2d (training-mode batch stats), single matmul ---
            # tnorm = kron(ones(Wo,Wo), I_Cout) with exact 0/1 bf16 entries;
            # the 1/(N*Ho*Wo) scale is applied in f32 afterwards.
            colsum = None
            colsq = None
            for b in range(n):
                cs = jnp.sum(ys[b], axis=0, keepdims=True)            # (1, L)
                cq = jnp.sum(ys[b] * ys[b], axis=0, keepdims=True)    # (1, L)
                colsum = cs if colsum is None else colsum + cs
                colsq = cq if colsq is None else colsq + cq
            stacked = jnp.concatenate([colsum, colsq], axis=0).astype(jnp.bfloat16)
            stats = jnp.dot(stacked, t_ref[...],
                            preferred_element_type=jnp.float32) * m["inv_m"]
            mean = stats[0:1, :]                                      # (1, L)
            var = stats[1:2, :] - mean * mean                         # biased var
            scale = g_ref[...] * jax.lax.rsqrt(var + _BN_EPS)         # (1, L)
            shift = be_ref[...] - mean * scale                        # (1, L)

            # --- fused BN affine + LeakyReLU(0.2): y*scale + shift, max(.,0.2.) ---
            outs = []
            for b in range(n):
                a = ys[b] * scale + shift
                outs.append(jnp.maximum(a, _LRELU_SLOPE * a))

            if li + 1 < num_layers:
                nref = scratch[li]
                for b in range(n):
                    nref[b * h_out:(b + 1) * h_out, :] = outs[b]
                in_ref = nref
            else:
                acts = outs

        # --- Flatten (NCHW permutation folded into wp) + Linear(F,1) + Sigmoid ---
        wp = wp_ref[...]                                              # (H3, W3*C3)
        rowsums = [jnp.sum(acts[b] * wp, axis=0, keepdims=True)       # (1, W3*C3)
                   for b in range(n)]
        stackd = jnp.concatenate(rowsums, axis=0)                     # (N, W3*C3)
        logits = jnp.sum(stackd, axis=1, keepdims=True) + fcb_ref[...]  # (N, 1)
        # Exact sigmoid: at (N,1) the divide is free and keeps outputs in [0,1].
        o_ref[...] = 1.0 / (1.0 + jnp.exp(-logits))

    return kernel


def discriminator_forward(x_nchw, consts):
    """Fused forward pass of the Discriminator (single pallas_call)."""
    n, c, h, w = x_nchw.shape
    # NCHW -> lane-dense 2-D layout: rows = n*H + h, lanes = w*C + c.
    # (This relayout is traced/jitted together with the kernel call.)
    x2d = jnp.transpose(x_nchw, (0, 2, 3, 1)).reshape(n * h, w * c)
    x2d = x2d.astype(jnp.float32)

    # Static per-layer metadata derived purely from shapes + the stride rule.
    args = [x2d]
    meta = []
    h_cur, w_cur = h, w
    for i, layer in enumerate(consts["layers"]):
        s = 2 if i % 3 == 1 else 1
        h_out = (h_cur - 3) // s + 1
        w_out = (w_cur - 3) // s + 1
        l_out = int(layer["bmat"].shape[1])
        meta.append({"h_in": h_cur, "h_out": h_out, "stride": s,
                     "l_out": l_out,
                     "inv_m": 1.0 / float(n * h_out * w_out)})
        args += [layer["bmat"], layer["tnorm"], layer["gamma_t"], layer["beta_t"]]
        h_cur, w_cur = h_out, w_out
    args += [consts["wp"], consts["fc_b"]]

    kernel = _make_discriminator_kernel(n, meta)
    vmem = pl.BlockSpec(memory_space=pltpu.MemorySpace.VMEM)
    # One f32 scratch buffer per intermediate activation (layers 1..L-1 input).
    scratch_shapes = [pltpu.VMEM((n * m["h_out"], m["l_out"]), jnp.float32)
                      for m in meta[:-1]]
    return pl.pallas_call(
        kernel,
        out_shape=jax.ShapeDtypeStruct((n, 1), jnp.float32),
        in_specs=[vmem] * len(args),
        out_specs=vmem,
        scratch_shapes=scratch_shapes,
    )(*args)


# --------------------------- host-side const building ---------------------------

def _build_conv_layer_consts(w_oihw, gamma, beta, h_in, w_in, stride):
    """Precomputes the kh-stacked conv matrix and BN helpers (batch-independent)."""
    w_np = np.asarray(w_oihw, dtype=np.float32)            # (Cout, Cin, 3, 3)
    c_out, c_in = w_np.shape[0], w_np.shape[1]
    h_out = (h_in - 3) // stride + 1
    w_out = (w_in - 3) // stride + 1
    l_in, l_out = w_in * c_in, w_out * c_out

    # bmat[kh*L_in + (wo*s + kw)*Cin + ci, wo*Cout + co] = W[co, ci, kh, kw]
    bmat = np.zeros((3 * l_in, l_out), dtype=np.float32)
    for kh in range(3):
        for kw in range(3):
            wk = w_np[:, :, kh, kw].T                       # (Cin, Cout)
            for wo in range(w_out):
                r0 = kh * l_in + (wo * stride + kw) * c_in
                bmat[r0:r0 + c_in, wo * c_out:(wo + 1) * c_out] = wk

    # Exact 0/1 channel-sum matrix (the 1/M factor is applied in-kernel in f32).
    tnorm = np.kron(np.ones((w_out, w_out), dtype=np.float32),
                    np.eye(c_out, dtype=np.float32))

    gamma_t = np.tile(np.asarray(gamma, np.float32), w_out).reshape(1, l_out)
    beta_t = np.tile(np.asarray(beta, np.float32), w_out).reshape(1, l_out)

    consts = {
        "bmat": jnp.asarray(bmat, dtype=jnp.bfloat16),
        "tnorm": jnp.asarray(tnorm, dtype=jnp.bfloat16),   # exact 0/1 in bf16
        "gamma_t": jnp.asarray(gamma_t, dtype=jnp.float32),
        "beta_t": jnp.asarray(beta_t, dtype=jnp.float32),
    }
    return consts, (h_out, w_out, c_out)


def build_fused_consts(params, c_in, h_in, w_in):
    """All kernel constants; none of them scale with the batch size."""
    layers = []
    h, w, c = h_in, w_in, c_in
    for i, layer in enumerate(params["conv"]):
        s = 2 if i % 3 == 1 else 1
        consts, (h, w, c) = _build_conv_layer_consts(
            layer["w"], layer["gamma"], layer["beta"], h, w, s)
        layers.append(consts)

    # Fold the PyTorch NCHW flatten permutation into the FC weight:
    # wp[h, w*C + c] = fc_w[0, c*H*W + h*W + w]   (batch-independent slab)
    fcw = np.asarray(params["fc_w"], np.float32).reshape(c, h, w)
    wp = fcw.transpose(1, 2, 0).reshape(h, w * c)
    fc_b = np.asarray(params["fc_b"], np.float32).reshape(1, 1)

    return {
        "layers": layers,
        "wp": jnp.asarray(wp, dtype=jnp.float32),
        "fc_b": jnp.asarray(fc_b, dtype=jnp.float32),
    }


def init_discriminator_params(key, ch_in, hidden_channels, flat_features):
    """Deterministic synthetic parameters matching the PyTorch module shapes."""
    params = {"conv": []}
    for ch_out in hidden_channels:
        key, kw_key = jax.random.split(key)
        # torch Conv2d weight shape (Cout, Cin, 3, 3).  The conv bias is
        # omitted: it is exactly cancelled by BatchNorm's mean subtraction.
        w = 0.1 * jax.random.normal(kw_key, (ch_out, ch_in, 3, 3),
                                    dtype=jnp.float32)
        gamma = jnp.ones((ch_out,), dtype=jnp.float32)   # BatchNorm2d defaults
        beta = jnp.zeros((ch_out,), dtype=jnp.float32)
        params["conv"].append({"w": w, "gamma": gamma, "beta": beta})
        ch_in = ch_out
    key, kfw, kfb = jax.random.split(key, 3)
    params["fc_w"] = 0.1 * jax.random.normal(kfw, (1, flat_features),
                                             dtype=jnp.float32)
    params["fc_b"] = 0.01 * jax.random.normal(kfb, (1,), dtype=jnp.float32)
    return params


# ------------------------------ pure-JAX reference ------------------------------

def reference_forward(x_nchw, params):
    """Plain-JAX f32 reference of the same forward pass (for validation)."""
    x = x_nchw.astype(jnp.float32)
    for i, layer in enumerate(params["conv"]):
        s = 2 if i % 3 == 1 else 1
        y = jax.lax.conv_general_dilated(
            x, layer["w"], window_strides=(s, s), padding="VALID",
            dimension_numbers=("NCHW", "OIHW", "NCHW"))
        mean = jnp.mean(y, axis=(0, 2, 3), keepdims=True)
        var = jnp.mean(jnp.square(y - mean), axis=(0, 2, 3), keepdims=True)
        y = (y - mean) * jax.lax.rsqrt(var + _BN_EPS)
        y = (y * layer["gamma"].reshape(1, -1, 1, 1)
             + layer["beta"].reshape(1, -1, 1, 1))
        x = jnp.where(y >= 0.0, y, _LRELU_SLOPE * y)
    flat = x.reshape(x.shape[0], -1)
    logits = flat @ params["fc_w"].T + params["fc_b"]
    return 1.0 / (1.0 + jnp.exp(-logits))


# ----------------------------------- main -----------------------------------

if __name__ == "__main__":
    key = jax.random.PRNGKey(0)
    key, xkey = jax.random.split(key)

    # Small shapes consistent with the module: NCHW, square spatial dims.
    N, C, H, W = 2, 4, 16, 16
    hidden_channels = [8, 16, 8]       # strides 1, 2, 1 -> 16 -> 14 -> 6 -> 4
    x = jax.random.normal(xkey, (N, C, H, W), dtype=jnp.float32)

    # Post-conv flatten size derived analytically (k=3, pad=0), like the
    # module derives it from `input_sample`.
    h = H
    for i in range(len(hidden_channels)):
        s = 2 if i % 3 == 1 else 1
        h = (h - 3) // s + 1
    flat_features = hidden_channels[-1] * h * h            # 8 * 4 * 4 = 128

    params = init_discriminator_params(key, C, hidden_channels, flat_features)
    consts = build_fused_consts(params, C, H, W)

    fwd = jax.jit(discriminator_forward)
    out = jax.block_until_ready(fwd(x, consts))
    assert out.shape == (N, 1)
    assert bool(jnp.all((out >= 0.0) & (out <= 1.0)))

    # Validate against the pure-JAX reference (loose tol: conv / BN-stat
    # matmuls run with bf16 operands inside the kernel).
    ref = jax.block_until_ready(jax.jit(reference_forward)(x, params))
    assert float(jnp.max(jnp.abs(out - ref))) < 5e-2

    print("KERNEL_OK")
</pallas_src>

<mosaic_0001>
module attributes {stable_mosaic.version = 11 : i64} {
  func.func @kernel(%arg0: memref<32x64xf32, #tpu.memory_space<vmem>>, %arg1: memref<192x112xbf16, #tpu.memory_space<vmem>>, %arg2: memref<112x112xbf16, #tpu.memory_space<vmem>>, %arg3: memref<1x112xf32, #tpu.memory_space<vmem>>, %arg4: memref<1x112xf32, #tpu.memory_space<vmem>>, %arg5: memref<336x96xbf16, #tpu.memory_space<vmem>>, %arg6: memref<96x96xbf16, #tpu.memory_space<vmem>>, %arg7: memref<1x96xf32, #tpu.memory_space<vmem>>, %arg8: memref<1x96xf32, #tpu.memory_space<vmem>>, %arg9: memref<288x32xbf16, #tpu.memory_space<vmem>>, %arg10: memref<32x32xbf16, #tpu.memory_space<vmem>>, %arg11: memref<1x32xf32, #tpu.memory_space<vmem>>, %arg12: memref<1x32xf32, #tpu.memory_space<vmem>>, %arg13: memref<4x32xf32, #tpu.memory_space<vmem>>, %arg14: memref<1x1xf32, #tpu.memory_space<vmem>>, %arg15: memref<2x1xf32, #tpu.memory_space<vmem>>, %arg16: memref<28x112xf32, #tpu.memory_space<vmem>>, %arg17: memref<12x96xf32, #tpu.memory_space<vmem>>) attributes {dimension_semantics = [], scalar_prefetch = 0 : i64, scratch_operands = 2 : i64, tpu.core_type = #tpu.core_type<tc>} {
    %c0 = arith.constant 0 : index
    %c0_0 = arith.constant 0 : index
    %0 = vector.load %arg0[%c0, %c0_0] : memref<32x64xf32, #tpu.memory_space<vmem>>, vector<14x64xf32>
    %c1 = arith.constant 1 : index
    %c0_1 = arith.constant 0 : index
    %1 = vector.load %arg0[%c1, %c0_1] : memref<32x64xf32, #tpu.memory_space<vmem>>, vector<14x64xf32>
    %c2 = arith.constant 2 : index
    %c0_2 = arith.constant 0 : index
    %2 = vector.load %arg0[%c2, %c0_2] : memref<32x64xf32, #tpu.memory_space<vmem>>, vector<14x64xf32>
    %3 = tpu.concatenate %0, %1, %2 in 1 : vector<14x64xf32>, vector<14x64xf32>, vector<14x64xf32> -> vector<14x192xf32>
    %4 = arith.truncf %3 : vector<14x192xf32> to vector<14x192xbf16>
    %c0_3 = arith.constant 0 : index
    %c0_4 = arith.constant 0 : index
    %5 = vector.load %arg1[%c0_3, %c0_4] : memref<192x112xbf16, #tpu.memory_space<vmem>>, vector<192x112xbf16>
    %cst = arith.constant dense<0.000000e+00> : vector<14x112xf32>
    %6 = tpu.matmul %4, %5, %cst {dimension_numbers = #tpu.dot_dimension_numbers<[1], [0], [0], [1], [0, 0, 1, 1], [], []>} : vector<14x192xbf16>, vector<192x112xbf16>, vector<14x112xf32> -> vector<14x112xf32>
    %c16 = arith.constant 16 : index
    %c0_5 = arith.constant 0 : index
    %7 = vector.load %arg0[%c16, %c0_5] : memref<32x64xf32, #tpu.memory_space<vmem>>, vector<14x64xf32>
    %c17 = arith.constant 17 : index
    %c0_6 = arith.constant 0 : index
    %8 = vector.load %arg0[%c17, %c0_6] : memref<32x64xf32, #tpu.memory_space<vmem>>, vector<14x64xf32>
    %c18 = arith.constant 18 : index
    %c0_7 = arith.constant 0 : index
    %9 = vector.load %arg0[%c18, %c0_7] : memref<32x64xf32, #tpu.memory_space<vmem>>, vector<14x64xf32>
    %10 = tpu.concatenate %7, %8, %9 in 1 : vector<14x64xf32>, vector<14x64xf32>, vector<14x64xf32> -> vector<14x192xf32>
    %11 = arith.truncf %10 : vector<14x192xf32> to vector<14x192xbf16>
    %c0_8 = arith.constant 0 : index
    %c0_9 = arith.constant 0 : index
    %12 = vector.load %arg1[%c0_8, %c0_9] : memref<192x112xbf16, #tpu.memory_space<vmem>>, vector<192x112xbf16>
    %cst_10 = arith.constant dense<0.000000e+00> : vector<14x112xf32>
    %13 = tpu.matmul %11, %12, %cst_10 {dimension_numbers = #tpu.dot_dimension_numbers<[1], [0], [0], [1], [0, 0, 1, 1], [], []>} : vector<14x192xbf16>, vector<192x112xbf16>, vector<14x112xf32> -> vector<14x112xf32>
    %cst_11 = arith.constant dense<0.000000e+00> : vector<112xf32>
    %14 = vector.multi_reduction <add>, %6, %cst_11 [0] : vector<14x112xf32> to vector<112xf32>
    %15 = vector.shape_cast %14 : vector<112xf32> to vector<1x112xf32>
    %16 = arith.mulf %6, %6 : vector<14x112xf32>
    %cst_12 = arith.constant dense<0.000000e+00> : vector<112xf32>
    %17 = vector.multi_reduction <add>, %16, %cst_12 [0] : vector<14x112xf32> to vector<112xf32>
    %18 = vector.shape_cast %17 : vector<112xf32> to vector<1x112xf32>
    %cst_13 = arith.constant dense<0.000000e+00> : vector<112xf32>
    %19 = vector.multi_reduction <add>, %13, %cst_13 [0] : vector<14x112xf32> to vector<112xf32>
    %20 = vector.shape_cast %19 : vector<112xf32> to vector<1x112xf32>
    %21 = arith.mulf %13, %13 : vector<14x112xf32>
    %cst_14 = arith.constant dense<0.000000e+00> : vector<112xf32>
    %22 = vector.multi_reduction <add>, %21, %cst_14 [0] : vector<14x112xf32> to vector<112xf32>
    %23 = vector.shape_cast %22 : vector<112xf32> to vector<1x112xf32>
    %24 = arith.addf %15, %20 : vector<1x112xf32>
    %25 = arith.addf %18, %23 : vector<1x112xf32>
    %26 = tpu.concatenate %24, %25 in 0 : vector<1x112xf32>, vector<1x112xf32> -> vector<2x112xf32>
    %27 = arith.truncf %26 : vector<2x112xf32> to vector<2x112xbf16>
    %c0_15 = arith.constant 0 : index
    %c0_16 = arith.constant 0 : index
    %28 = vector.load %arg2[%c0_15, %c0_16] : memref<112x112xbf16, #tpu.memory_space<vmem>>, vector<112x112xbf16>
    %cst_17 = arith.constant dense<0.000000e+00> : vector<2x112xf32>
    %29 = tpu.matmul %27, %28, %cst_17 {dimension_numbers = #tpu.dot_dimension_numbers<[1], [0], [0], [1], [0, 0, 1, 1], [], []>} : vector<2x112xbf16>, vector<112x112xbf16>, vector<2x112xf32> -> vector<2x112xf32>
    %cst_18 = arith.constant 0.00255102036 : f32
    %30 = vector.broadcast %cst_18 : f32 to vector<2x112xf32>
    %31 = arith.mulf %29, %30 : vector<2x112xf32>
    %32 = vector.extract_strided_slice %31 {offsets = [0, 0], sizes = [1, 112], strides = [1, 1]} : vector<2x112xf32> to vector<1x112xf32>
    %33 = vector.extract_strided_slice %31 {offsets = [1, 0], sizes = [1, 112], strides = [1, 1]} : vector<2x112xf32> to vector<1x112xf32>
    %34 = arith.mulf %32, %32 : vector<1x112xf32>
    %35 = arith.subf %33, %34 : vector<1x112xf32>
    %c0_19 = arith.constant 0 : index
    %c0_20 = arith.constant 0 : index
    %36 = vector.load %arg3[%c0_19, %c0_20] : memref<1x112xf32, #tpu.memory_space<vmem>>, vector<1x112xf32>
    %cst_21 = arith.constant 9.99999974E-6 : f32
    %37 = vector.broadcast %cst_21 : f32 to vector<1x112xf32>
    %38 = arith.addf %35, %37 : vector<1x112xf32>
    %39 = math.rsqrt %38 : vector<1x112xf32>
    %40 = arith.mulf %36, %39 : vector<1x112xf32>
    %c0_22 = arith.constant 0 : index
    %c0_23 = arith.constant 0 : index
    %41 = vector.load %arg4[%c0_22, %c0_23] : memref<1x112xf32, #tpu.memory_space<vmem>>, vector<1x112xf32>
    %42 = arith.mulf %32, %40 : vector<1x112xf32>
    %43 = arith.subf %41, %42 : vector<1x112xf32>
    %44 = vector.broadcast %40 : vector<1x112xf32> to vector<14x112xf32>
    %45 = arith.mulf %6, %44 : vector<14x112xf32>
    %46 = vector.broadcast %43 : vector<1x112xf32> to vector<14x112xf32>
    %47 = arith.addf %45, %46 : vector<14x112xf32>
    %cst_24 = arith.constant 2.000000e-01 : f32
    %48 = vector.broadcast %cst_24 : f32 to vector<14x112xf32>
    %49 = arith.mulf %48, %47 : vector<14x112xf32>
    %50 = arith.maximumf %47, %49 : vector<14x112xf32>
    %51 = vector.broadcast %40 : vector<1x112xf32> to vector<14x112xf32>
    %52 = arith.mulf %13, %51 : vector<14x112xf32>
    %53 = vector.broadcast %43 : vector<1x112xf32> to vector<14x112xf32>
    %54 = arith.addf %52, %53 : vector<14x112xf32>
    %cst_25 = arith.constant 2.000000e-01 : f32
    %55 = vector.broadcast %cst_25 : f32 to vector<14x112xf32>
    %56 = arith.mulf %55, %54 : vector<14x112xf32>
    %57 = arith.maximumf %54, %56 : vector<14x112xf32>
    %c0_26 = arith.constant 0 : index
    %c0_27 = arith.constant 0 : index
    %58 = vector.load %arg16[%c0_26, %c0_27] : memref<28x112xf32, #tpu.memory_space<vmem>>, vector<14x112xf32>
    tpu.vector_store %arg16[%c0_26, %c0_27], %50 {strides = array<i32>} : memref<28x112xf32, #tpu.memory_space<vmem>>, vector<14x112xf32>,
    %c14 = arith.constant 14 : index
    %c0_28 = arith.constant 0 : index
    %59 = vector.load %arg16[%c14, %c0_28] : memref<28x112xf32, #tpu.memory_space<vmem>>, vector<14x112xf32>
    tpu.vector_store %arg16[%c14, %c0_28], %57 {strides = array<i32>} : memref<28x112xf32, #tpu.memory_space<vmem>>, vector<14x112xf32>,
    %c0_29 = arith.constant 0 : index
    %c0_30 = arith.constant 0 : index
    %60 = tpu.strided_load %arg16[%c0_29, %c0_30] {strides = array<i32: 2, 1>} : memref<28x112xf32, #tpu.memory_space<vmem>>, vector<6x112xf32>
    %c1_31 = arith.constant 1 : index
    %c0_32 = arith.constant 0 : index
    %61 = tpu.strided_load %arg16[%c1_31, %c0_32] {strides = array<i32: 2, 1>} : memref<28x112xf32, #tpu.memory_space<vmem>>, vector<6x112xf32>
    %c2_33 = arith.constant 2 : index
    %c0_34 = arith.constant 0 : index
    %62 = tpu.strided_load %arg16[%c2_33, %c0_34] {strides = array<i32: 2, 1>} : memref<28x112xf32, #tpu.memory_space<vmem>>, vector<6x112xf32>
    %63 = tpu.concatenate %60, %61, %62 in 1 : vector<6x112xf32>, vector<6x112xf32>, vector<6x112xf32> -> vector<6x336xf32>
    %64 = arith.truncf %63 : vector<6x336xf32> to vector<6x336xbf16>
    %c0_35 = arith.constant 0 : index
    %c0_36 = arith.constant 0 : index
    %65 = vector.load %arg5[%c0_35, %c0_36] : memref<336x96xbf16, #tpu.memory_space<vmem>>, vector<336x96xbf16>
    %cst_37 = arith.constant dense<0.000000e+00> : vector<6x96xf32>
    %66 = tpu.matmul %64, %65, %cst_37 {dimension_numbers = #tpu.dot_dimension_numbers<[1], [0], [0], [1], [0, 0, 1, 1], [], []>} : vector<6x336xbf16>, vector<336x96xbf16>, vector<6x96xf32> -> vector<6x96xf32>
    %c14_38 = arith.constant 14 : index
    %c0_39 = arith.constant 0 : index
    %67 = tpu.strided_load %arg16[%c14_38, %c0_39] {strides = array<i32: 2, 1>} : memref<28x112xf32, #tpu.memory_space<vmem>>, vector<6x112xf32>
    %c15 = arith.constant 15 : index
    %c0_40 = arith.constant 0 : index
    %68 = tpu.strided_load %arg16[%c15, %c0_40] {strides = array<i32: 2, 1>} : memref<28x112xf32, #tpu.memory_space<vmem>>, vector<6x112xf32>
    %c16_41 = arith.constant 16 : index
    %c0_42 = arith.constant 0 : index
    %69 = tpu.strided_load %arg16[%c16_41, %c0_42] {strides = array<i32: 2, 1>} : memref<28x112xf32, #tpu.memory_space<vmem>>, vector<6x112xf32>
    %70 = tpu.concatenate %67, %68, %69 in 1 : vector<6x112xf32>, vector<6x112xf32>, vector<6x112xf32> -> vector<6x336xf32>
    %71 = arith.truncf %70 : vector<6x336xf32> to vector<6x336xbf16>
    %c0_43 = arith.constant 0 : index
    %c0_44 = arith.constant 0 : index
    %72 = vector.load %arg5[%c0_43, %c0_44] : memref<336x96xbf16, #tpu.memory_space<vmem>>, vector<336x96xbf16>
    %cst_45 = arith.constant dense<0.000000e+00> : vector<6x96xf32>
    %73 = tpu.matmul %71, %72, %cst_45 {dimension_numbers = #tpu.dot_dimension_numbers<[1], [0], [0], [1], [0, 0, 1, 1], [], []>} : vector<6x336xbf16>, vector<336x96xbf16>, vector<6x96xf32> -> vector<6x96xf32>
    %cst_46 = arith.constant dense<0.000000e+00> : vector<96xf32>
    %74 = vector.multi_reduction <add>, %66, %cst_46 [0] : vector<6x96xf32> to vector<96xf32>
    %75 = vector.shape_cast %74 : vector<96xf32> to vector<1x96xf32>
    %76 = arith.mulf %66, %66 : vector<6x96xf32>
    %cst_47 = arith.constant dense<0.000000e+00> : vector<96xf32>
    %77 = vector.multi_reduction <add>, %76, %cst_47 [0] : vector<6x96xf32> to vector<96xf32>
    %78 = vector.shape_cast %77 : vector<96xf32> to vector<1x96xf32>
    %cst_48 = arith.constant dense<0.000000e+00> : vector<96xf32>
    %79 = vector.multi_reduction <add>, %73, %cst_48 [0] : vector<6x96xf32> to vector<96xf32>
    %80 = vector.shape_cast %79 : vector<96xf32> to vector<1x96xf32>
    %81 = arith.mulf %73, %73 : vector<6x96xf32>
    %cst_49 = arith.constant dense<0.000000e+00> : vector<96xf32>
    %82 = vector.multi_reduction <add>, %81, %cst_49 [0] : vector<6x96xf32> to vector<96xf32>
    %83 = vector.shape_cast %82 : vector<96xf32> to vector<1x96xf32>
    %84 = arith.addf %75, %80 : vector<1x96xf32>
    %85 = arith.addf %78, %83 : vector<1x96xf32>
    %86 = tpu.concatenate %84, %85 in 0 : vector<1x96xf32>, vector<1x96xf32> -> vector<2x96xf32>
    %87 = arith.truncf %86 : vector<2x96xf32> to vector<2x96xbf16>
    %c0_50 = arith.constant 0 : index
    %c0_51 = arith.constant 0 : index
    %88 = vector.load %arg6[%c0_50, %c0_51] : memref<96x96xbf16, #tpu.memory_space<vmem>>, vector<96x96xbf16>
    %cst_52 = arith.constant dense<0.000000e+00> : vector<2x96xf32>
    %89 = tpu.matmul %87, %88, %cst_52 {dimension_numbers = #tpu.dot_dimension_numbers<[1], [0], [0], [1], [0, 0, 1, 1], [], []>} : vector<2x96xbf16>, vector<96x96xbf16>, vector<2x96xf32> -> vector<2x96xf32>
    %cst_53 = arith.constant 0.013888889 : f32
    %90 = vector.broadcast %cst_53 : f32 to vector<2x96xf32>
    %91 = arith.mulf %89, %90 : vector<2x96xf32>
    %92 = vector.extract_strided_slice %91 {offsets = [0, 0], sizes = [1, 96], strides = [1, 1]} : vector<2x96xf32> to vector<1x96xf32>
    %93 = vector.extract_strided_slice %91 {offsets = [1, 0], sizes = [1, 96], strides = [1, 1]} : vector<2x96xf32> to vector<1x96xf32>
    %94 = arith.mulf %92, %92 : vector<1x96xf32>
    %95 = arith.subf %93, %94 : vector<1x96xf32>
    %c0_54 = arith.constant 0 : index
    %c0_55 = arith.constant 0 : index
    %96 = vector.load %arg7[%c0_54, %c0_55] : memref<1x96xf32, #tpu.memory_space<vmem>>, vector<1x96xf32>
    %cst_56 = arith.constant 9.99999974E-6 : f32
    %97 = vector.broadcast %cst_56 : f32 to vector<1x96xf32>
    %98 = arith.addf %95, %97 : vector<1x96xf32>
    %99 = math.rsqrt %98 : vector<1x96xf32>
    %100 = arith.mulf %96, %99 : vector<1x96xf32>
    %c0_57 = arith.constant 0 : index
    %c0_58 = arith.constant 0 : index
    %101 = vector.load %arg8[%c0_57, %c0_58] : memref<1x96xf32, #tpu.memory_space<vmem>>, vector<1x96xf32>
    %102 = arith.mulf %92, %100 : vector<1x96xf32>
    %103 = arith.subf %101, %102 : vector<1x96xf32>
    %104 = vector.broadcast %100 : vector<1x96xf32> to vector<6x96xf32>
    %105 = arith.mulf %66, %104 : vector<6x96xf32>
    %106 = vector.broadcast %103 : vector<1x96xf32> to vector<6x96xf32>
    %107 = arith.addf %105, %106 : vector<6x96xf32>
    %cst_59 = arith.constant 2.000000e-01 : f32
    %108 = vector.broadcast %cst_59 : f32 to vector<6x96xf32>
    %109 = arith.mulf %108, %107 : vector<6x96xf32>
    %110 = arith.maximumf %107, %109 : vector<6x96xf32>
    %111 = vector.broadcast %100 : vector<1x96xf32> to vector<6x96xf32>
    %112 = arith.mulf %73, %111 : vector<6x96xf32>
    %113 = vector.broadcast %103 : vector<1x96xf32> to vector<6x96xf32>
    %114 = arith.addf %112, %113 : vector<6x96xf32>
    %cst_60 = arith.constant 2.000000e-01 : f32
    %115 = vector.broadcast %cst_60 : f32 to vector<6x96xf32>
    %116 = arith.mulf %115, %114 : vector<6x96xf32>
    %117 = arith.maximumf %114, %116 : vector<6x96xf32>
    %c0_61 = arith.constant 0 : index
    %c0_62 = arith.constant 0 : index
    %118 = vector.load %arg17[%c0_61, %c0_62] : memref<12x96xf32, #tpu.memory_space<vmem>>, vector<6x96xf32>
    tpu.vector_store %arg17[%c0_61, %c0_62], %110 {strides = array<i32>} : memref<12x96xf32, #tpu.memory_space<vmem>>, vector<6x96xf32>,
    %c6 = arith.constant 6 : index
    %c0_63 = arith.constant 0 : index
    %119 = vector.load %arg17[%c6, %c0_63] : memref<12x96xf32, #tpu.memory_space<vmem>>, vector<6x96xf32>
    tpu.vector_store %arg17[%c6, %c0_63], %117 {strides = array<i32>} : memref<12x96xf32, #tpu.memory_space<vmem>>, vector<6x96xf32>,
    %c0_64 = arith.constant 0 : index
    %c0_65 = arith.constant 0 : index
    %120 = vector.load %arg17[%c0_64, %c0_65] : memref<12x96xf32, #tpu.memory_space<vmem>>, vector<4x96xf32>
    %c1_66 = arith.constant 1 : index
    %c0_67 = arith.constant 0 : index
    %121 = vector.load %arg17[%c1_66, %c0_67] : memref<12x96xf32, #tpu.memory_space<vmem>>, vector<4x96xf32>
    %c2_68 = arith.constant 2 : index
    %c0_69 = arith.constant 0 : index
    %122 = vector.load %arg17[%c2_68, %c0_69] : memref<12x96xf32, #tpu.memory_space<vmem>>, vector<4x96xf32>
    %123 = tpu.concatenate %120, %121, %122 in 1 : vector<4x96xf32>, vector<4x96xf32>, vector<4x96xf32> -> vector<4x288xf32>
    %124 = arith.truncf %123 : vector<4x288xf32> to vector<4x288xbf16>
    %c0_70 = arith.constant 0 : index
    %c0_71 = arith.constant 0 : index
    %125 = vector.load %arg9[%c0_70, %c0_71] : memref<288x32xbf16, #tpu.memory_space<vmem>>, vector<288x32xbf16>
    %cst_72 = arith.constant dense<0.000000e+00> : vector<4x32xf32>
    %126 = tpu.matmul %124, %125, %cst_72 {dimension_numbers = #tpu.dot_dimension_numbers<[1], [0], [0], [1], [0, 0, 1, 1], [], []>} : vector<4x288xbf16>, vector<288x32xbf16>, vector<4x32xf32> -> vector<4x32xf32>
    %c6_73 = arith.constant 6 : index
    %c0_74 = arith.constant 0 : index
    %127 = vector.load %arg17[%c6_73, %c0_74] : memref<12x96xf32, #tpu.memory_space<vmem>>, vector<4x96xf32>
    %c7 = arith.constant 7 : index
    %c0_75 = arith.constant 0 : index
    %128 = vector.load %arg17[%c7, %c0_75] : memref<12x96xf32, #tpu.memory_space<vmem>>, vector<4x96xf32>
    %c8 = arith.constant 8 : index
    %c0_76 = arith.constant 0 : index
    %129 = vector.load %arg17[%c8, %c0_76] : memref<12x96xf32, #tpu.memory_space<vmem>>, vector<4x96xf32>
    %130 = tpu.concatenate %127, %128, %129 in 1 : vector<4x96xf32>, vector<4x96xf32>, vector<4x96xf32> -> vector<4x288xf32>
    %131 = arith.truncf %130 : vector<4x288xf32> to vector<4x288xbf16>
    %c0_77 = arith.constant 0 : index
    %c0_78 = arith.constant 0 : index
    %132 = vector.load %arg9[%c0_77, %c0_78] : memref<288x32xbf16, #tpu.memory_space<vmem>>, vector<288x32xbf16>
    %cst_79 = arith.constant dense<0.000000e+00> : vector<4x32xf32>
    %133 = tpu.matmul %131, %132, %cst_79 {dimension_numbers = #tpu.dot_dimension_numbers<[1], [0], [0], [1], [0, 0, 1, 1], [], []>} : vector<4x288xbf16>, vector<288x32xbf16>, vector<4x32xf32> -> vector<4x32xf32>
    %cst_80 = arith.constant dense<0.000000e+00> : vector<32xf32>
    %134 = vector.multi_reduction <add>, %126, %cst_80 [0] : vector<4x32xf32> to vector<32xf32>
    %135 = vector.shape_cast %134 : vector<32xf32> to vector<1x32xf32>
    %136 = arith.mulf %126, %126 : vector<4x32xf32>
    %cst_81 = arith.constant dense<0.000000e+00> : vector<32xf32>
    %137 = vector.multi_reduction <add>, %136, %cst_81 [0] : vector<4x32xf32> to vector<32xf32>
    %138 = vector.shape_cast %137 : vector<32xf32> to vector<1x32xf32>
    %cst_82 = arith.constant dense<0.000000e+00> : vector<32xf32>
    %139 = vector.multi_reduction <add>, %133, %cst_82 [0] : vector<4x32xf32> to vector<32xf32>
    %140 = vector.shape_cast %139 : vector<32xf32> to vector<1x32xf32>
    %141 = arith.mulf %133, %133 : vector<4x32xf32>
    %cst_83 = arith.constant dense<0.000000e+00> : vector<32xf32>
    %142 = vector.multi_reduction <add>, %141, %cst_83 [0] : vector<4x32xf32> to vector<32xf32>
    %143 = vector.shape_cast %142 : vector<32xf32> to vector<1x32xf32>
    %144 = arith.addf %135, %140 : vector<1x32xf32>
    %145 = arith.addf %138, %143 : vector<1x32xf32>
    %146 = tpu.concatenate %144, %145 in 0 : vector<1x32xf32>, vector<1x32xf32> -> vector<2x32xf32>
    %147 = arith.truncf %146 : vector<2x32xf32> to vector<2x32xbf16>
    %c0_84 = arith.constant 0 : index
    %c0_85 = arith.constant 0 : index
    %148 = vector.load %arg10[%c0_84, %c0_85] : memref<32x32xbf16, #tpu.memory_space<vmem>>, vector<32x32xbf16>
    %cst_86 = arith.constant dense<0.000000e+00> : vector<2x32xf32>
    %149 = tpu.matmul %147, %148, %cst_86 {dimension_numbers = #tpu.dot_dimension_numbers<[1], [0], [0], [1], [0, 0, 1, 1], [], []>} : vector<2x32xbf16>, vector<32x32xbf16>, vector<2x32xf32> -> vector<2x32xf32>
    %cst_87 = arith.constant 3.125000e-02 : f32
    %150 = vector.broadcast %cst_87 : f32 to vector<2x32xf32>
    %151 = arith.mulf %149, %150 : vector<2x32xf32>
    %152 = vector.extract_strided_slice %151 {offsets = [0, 0], sizes = [1, 32], strides = [1, 1]} : vector<2x32xf32> to vector<1x32xf32>
    %153 = vector.extract_strided_slice %151 {offsets = [1, 0], sizes = [1, 32], strides = [1, 1]} : vector<2x32xf32> to vector<1x32xf32>
    %154 = arith.mulf %152, %152 : vector<1x32xf32>
    %155 = arith.subf %153, %154 : vector<1x32xf32>
    %c0_88 = arith.constant 0 : index
    %c0_89 = arith.constant 0 : index
    %156 = vector.load %arg11[%c0_88, %c0_89] : memref<1x32xf32, #tpu.memory_space<vmem>>, vector<1x32xf32>
    %cst_90 = arith.constant 9.99999974E-6 : f32
    %157 = vector.broadcast %cst_90 : f32 to vector<1x32xf32>
    %158 = arith.addf %155, %157 : vector<1x32xf32>
    %159 = math.rsqrt %158 : vector<1x32xf32>
    %160 = arith.mulf %156, %159 : vector<1x32xf32>
    %c0_91 = arith.constant 0 : index
    %c0_92 = arith.constant 0 : index
    %161 = vector.load %arg12[%c0_91, %c0_92] : memref<1x32xf32, #tpu.memory_space<vmem>>, vector<1x32xf32>
    %162 = arith.mulf %152, %160 : vector<1x32xf32>
    %163 = arith.subf %161, %162 : vector<1x32xf32>
    %164 = vector.broadcast %160 : vector<1x32xf32> to vector<4x32xf32>
    %165 = arith.mulf %126, %164 : vector<4x32xf32>
    %166 = vector.broadcast %163 : vector<1x32xf32> to vector<4x32xf32>
    %167 = arith.addf %165, %166 : vector<4x32xf32>
    %cst_93 = arith.constant 2.000000e-01 : f32
    %168 = vector.broadcast %cst_93 : f32 to vector<4x32xf32>
    %169 = arith.mulf %168, %167 : vector<4x32xf32>
    %170 = arith.maximumf %167, %169 : vector<4x32xf32>
    %171 = vector.broadcast %160 : vector<1x32xf32> to vector<4x32xf32>
    %172 = arith.mulf %133, %171 : vector<4x32xf32>
    %173 = vector.broadcast %163 : vector<1x32xf32> to vector<4x32xf32>
    %174 = arith.addf %172, %173 : vector<4x32xf32>
    %cst_94 = arith.constant 2.000000e-01 : f32
    %175 = vector.broadcast %cst_94 : f32 to vector<4x32xf32>
    %176 = arith.mulf %175, %174 : vector<4x32xf32>
    %177 = arith.maximumf %174, %176 : vector<4x32xf32>
    %c0_95 = arith.constant 0 : index
    %c0_96 = arith.constant 0 : index
    %178 = vector.load %arg13[%c0_95, %c0_96] : memref<4x32xf32, #tpu.memory_space<vmem>>, vector<4x32xf32>
    %179 = arith.mulf %170, %178 : vector<4x32xf32>
    %cst_97 = arith.constant dense<0.000000e+00> : vector<32xf32>
    %180 = vector.multi_reduction <add>, %179, %cst_97 [0] : vector<4x32xf32> to vector<32xf32>
    %181 = vector.shape_cast %180 : vector<32xf32> to vector<1x32xf32>
    %182 = arith.mulf %177, %178 : vector<4x32xf32>
    %cst_98 = arith.constant dense<0.000000e+00> : vector<32xf32>
    %183 = vector.multi_reduction <add>, %182, %cst_98 [0] : vector<4x32xf32> to vector<32xf32>
    %184 = vector.shape_cast %183 : vector<32xf32> to vector<1x32xf32>
    %185 = tpu.concatenate %181, %184 in 0 : vector<1x32xf32>, vector<1x32xf32> -> vector<2x32xf32>
    %cst_99 = arith.constant dense<0.000000e+00> : vector<2xf32>
    %186 = vector.multi_reduction <add>, %185, %cst_99 [1] : vector<2x32xf32> to vector<2xf32>
    %187 = vector.shape_cast %186 : vector<2xf32> to vector<2x1xf32>
    %c0_100 = arith.constant 0 : index
    %c0_101 = arith.constant 0 : index
    %188 = vector.load %arg14[%c0_100, %c0_101] : memref<1x1xf32, #tpu.memory_space<vmem>>, vector<1x1xf32>
    %189 = vector.broadcast %188 : vector<1x1xf32> to vector<2x1xf32>
    %190 = arith.addf %187, %189 : vector<2x1xf32>
    %cst_102 = arith.constant 0.000000e+00 : f32
    %191 = vector.broadcast %cst_102 : f32 to vector<2x1xf32>
    %192 = arith.subf %191, %190 : vector<2x1xf32>
    %193 = math.exp %192 : vector<2x1xf32>
    %cst_103 = arith.constant 1.000000e+00 : f32
    %194 = vector.broadcast %cst_103 : f32 to vector<2x1xf32>
    %195 = arith.addf %194, %193 : vector<2x1xf32>
    %cst_104 = arith.constant 1.000000e+00 : f32
    %196 = vector.broadcast %cst_104 : f32 to vector<2x1xf32>
    %197 = arith.divf %196, %195 : vector<2x1xf32>
    %c0_105 = arith.constant 0 : index
    %c0_106 = arith.constant 0 : index
    %198 = vector.load %arg15[%c0_105, %c0_106] : memref<2x1xf32, #tpu.memory_space<vmem>>, vector<2x1xf32>
    tpu.vector_store %arg15[%c0_105, %c0_106], %197 {strides = array<i32>} : memref<2x1xf32, #tpu.memory_space<vmem>>, vector<2x1xf32>,
    return
  }
}

</mosaic_0001>

<llo_original>
// kernel: discriminator_forward.1
$region0: #{discriminator_forward.1}
  #allocation0 [shape = 'u32[]', space=smem, size = 0x4, offset = 0x4, fixed_abs, tag = 'smem constant byte address 0x4 - core index']
  #allocation1 [shape = 'u32[144,128]{1,0:T(1,128)}', space=vmem, size = 0x12000, scoped, tag = 'internal scratch']
  #allocation2 [shape = 'f32[28,112]{1,0:T(8,128)}', space=vmem, size = 0x4000, scoped, tag = 'scratch operand']
  #allocation3 [shape = 'f32[12,96]{1,0:T(8,128)}', space=vmem, size = 0x2000, scoped, tag = 'scratch operand']
  #allocation4 [shape = 'f32[1,1]{1,0:T(1,128)S(1)}', space=vmem, size = 0x200, scoped, tag = 'scoped memory for discriminator_forward.1']
  %s0 = inlined_call_operand.vmem [shape: f32[32,64], index: 0, kind: input, shape index: {}]
  %s1 = inlined_call_operand.vmem [shape: bf16[192,112], index: 1, kind: input, shape index: {}]
  %s2 = inlined_call_operand.vmem [shape: bf16[112,112], index: 2, kind: input, shape index: {}]
  %s3 = inlined_call_operand.vmem [shape: f32[1,112], index: 3, kind: input, shape index: {}]
  %s4 = inlined_call_operand.vmem [shape: f32[1,112], index: 4, kind: input, shape index: {}]
  %s5 = inlined_call_operand.vmem [shape: bf16[336,96], index: 5, kind: input, shape index: {}]
  %s6 = inlined_call_operand.vmem [shape: bf16[96,96], index: 6, kind: input, shape index: {}]
  %s7 = inlined_call_operand.vmem [shape: f32[1,96], index: 7, kind: input, shape index: {}]
  %s8 = inlined_call_operand.vmem [shape: f32[1,96], index: 8, kind: input, shape index: {}]
  %s9 = inlined_call_operand.vmem [shape: bf16[288,32], index: 9, kind: input, shape index: {}]
  %s10 = inlined_call_operand.vmem [shape: bf16[32,32], index: 10, kind: input, shape index: {}]
  %s11 = inlined_call_operand.vmem [shape: f32[1,32], index: 11, kind: input, shape index: {}]
  %s12 = inlined_call_operand.vmem [shape: f32[1,32], index: 12, kind: input, shape index: {}]
  %s13 = inlined_call_operand.vmem [shape: f32[4,32], index: 13, kind: input, shape index: {}]
  %s14 = inlined_call_operand.<no memory space> [shape: f32[1,1], index: 14, kind: input, shape index: {}]
  %s15 = inlined_call_operand.vmem [shape: f32[2,1], index: 15, kind: output, shape index: {}]
  %s16 = sld [smem:[#allocation0]]
  $region70: #{discriminator_forward.1} parent=0
    _
  %s18 = ssub.s32 1, %s16
  %s19 = scalar_select 0, %s18, %s16
  %v20 = vstv %s14
  %21 = vst [vmem:[#allocation4] sm:$0x1] %v20
  // Predicated region
  $region2: #{discriminator_forward.1} parent=0 // pred_check
    _
  $region3: #{discriminator_forward.1} parent=0 // pred_check_branch
    %23 = sbr.rel (0) target = $region5
  $region4: #{discriminator_forward.1} parent=0 // pred_region
    _
  $region5: #{discriminator_forward.1} parent=0 // pred_fallthru
    _
  // Predicated region
  $region6: #{discriminator_forward.1} parent=0 // pred_check
    _
  $region7: #{discriminator_forward.1} parent=0 // pred_check_branch
    %25 = sbr.rel (0) target = $region9
  $region8: #{discriminator_forward.1} parent=0 // pred_region
    _
  $region9: #{discriminator_forward.1} parent=0 // pred_fallthru
    _
  // Predicated region
  $region10: #{discriminator_forward.1} parent=0 // pred_check
    _
  $region11: #{discriminator_forward.1} parent=0 // pred_check_branch
    %27 = sbr.rel (0) target = $region13
  $region12: #{discriminator_forward.1} parent=0 // pred_region
    _
  $region13: #{discriminator_forward.1} parent=0 // pred_fallthru
    _
  // Predicated region
  $region14: #{discriminator_forward.1} parent=0 // pred_check
    _
  $region15: #{discriminator_forward.1} parent=0 // pred_check_branch
    %29 = sbr.rel (0) target = $region17
  $region16: #{discriminator_forward.1} parent=0 // pred_region
    _
  $region17: #{discriminator_forward.1} parent=0 // pred_fallthru
    _
  // Predicated region
  $region18: #{discriminator_forward.1} parent=0 // pred_check
    _
  $region19: #{discriminator_forward.1} parent=0 // pred_check_branch
    %31 = sbr.rel (0) target = $region21
  $region20: #{discriminator_forward.1} parent=0 // pred_region
    _
  $region21: #{discriminator_forward.1} parent=0 // pred_fallthru
    _
  // Predicated region
  $region22: #{discriminator_forward.1} parent=0 // pred_check
    _
  $region23: #{discriminator_forward.1} parent=0 // pred_check_branch
    %33 = sbr.rel (0) target = $region25
  $region24: #{discriminator_forward.1} parent=0 // pred_region
    _
  $region25: #{discriminator_forward.1} parent=0 // pred_fallthru
    _
  // Predicated region
  $region26: #{discriminator_forward.1} parent=0 // pred_check
    _
  $region27: #{discriminator_forward.1} parent=0 // pred_check_branch
    %35 = sbr.rel (0) target = $region29
  $region28: #{discriminator_forward.1} parent=0 // pred_region
    _
  $region29: #{discriminator_forward.1} parent=0 // pred_fallthru
    _
  // Predicated region
  $region30: #{discriminator_forward.1} parent=0 // pred_check
    _
  $region31: #{discriminator_forward.1} parent=0 // pred_check_branch
    %37 = sbr.rel (0) target = $region33
  $region32: #{discriminator_forward.1} parent=0 // pred_region
    _
  $region33: #{discriminator_forward.1} parent=0 // pred_fallthru
    _
  // Predicated region
  $region34: #{discriminator_forward.1} parent=0 // pred_check
    _
  $region35: #{discriminator_forward.1} parent=0 // pred_check_branch
    %39 = sbr.rel (0) target = $region37
  $region36: #{discriminator_forward.1} parent=0 // pred_region
    _
  $region37: #{discriminator_forward.1} parent=0 // pred_fallthru
    _
  // Predicated region
  $region38: #{discriminator_forward.1} parent=0 // pred_check
    _
  $region39: #{discriminator_forward.1} parent=0 // pred_check_branch
    %41 = sbr.rel (0) target = $region41
  $region40: #{discriminator_forward.1} parent=0 // pred_region
    _
  $region41: #{discriminator_forward.1} parent=0 // pred_fallthru
    _
  // Predicated region
  $region42: #{discriminator_forward.1} parent=0 // pred_check
    _
  $region43: #{discriminator_forward.1} parent=0 // pred_check_branch
    %43 = sbr.rel (0) target = $region45
  $region44: #{discriminator_forward.1} parent=0 // pred_region
    _
  $region45: #{discriminator_forward.1} parent=0 // pred_fallthru
    _
  // Predicated region
  $region46: #{discriminator_forward.1} parent=0 // pred_check
    _
  $region47: #{discriminator_forward.1} parent=0 // pred_check_branch
    %45 = sbr.rel (0) target = $region49
  $region48: #{discriminator_forward.1} parent=0 // pred_region
    _
  $region49: #{discriminator_forward.1} parent=0 // pred_fallthru
    _
  // Predicated region
  $region50: #{discriminator_forward.1} parent=0 // pred_check
    _
  $region51: #{discriminator_forward.1} parent=0 // pred_check_branch
    %47 = sbr.rel (0) target = $region53
  $region52: #{discriminator_forward.1} parent=0 // pred_region
    _
  $region53: #{discriminator_forward.1} parent=0 // pred_fallthru
    _
  // Predicated region
  $region54: #{discriminator_forward.1} parent=0 // pred_check
    _
  $region55: #{discriminator_forward.1} parent=0 // pred_check_branch
    %49 = sbr.rel (0) target = $region57
  $region56: #{discriminator_forward.1} parent=0 // pred_region
    _
  $region57: #{discriminator_forward.1} parent=0 // pred_fallthru
    _
  // Predicated region
  $region58: #{discriminator_forward.1} parent=0 // pred_check
    _
  $region59: #{discriminator_forward.1} parent=0 // pred_check_branch
    %51 = sbr.rel (0) target = $region61
  $region60: #{discriminator_forward.1} parent=0 // pred_region
    _
  $region61: #{discriminator_forward.1} parent=0 // pred_fallthru
    _
  %v53 = vld [vmem:[%s0] sm:$0xff]
  %v54 = vld [vmem:[%s0 + $0x8] sm:$0x3f]
  %v55 = vld [vmem:[%s0 + $0x1] sm:$0xff]
  %v56 = vld [vmem:[%s0 + $0x9] sm:$0x3f]
  %v57 = vld [vmem:[%s0 + $0x2] sm:$0xff]
  %v58 = vld [vmem:[%s0 + $0xa] sm:$0x3f]
  %61 = vrot.lane.b32.xlu0 %v55, 64
  %v62 = vpop.permute.xlu0 %61
  %63 = vrot.lane.b32.xlu0 %v56, 64
  %v64 = vpop.permute.xlu0 %63
  %vm67 = vcmask 523264
  %v68 = vsel %vm67, %v53, %v62
  %v69 = vsel %vm67, %v54, %v64
  %v70 = vpack.c.bf16 %v69, %v68
  %v71 = vpack.c.bf16 %v58, %v57
  %v72 = vld [vmem:[%s1] sm:$0xf]
  %v73 = vld [vmem:[%s1 + $0x4] sm:$0xf]
  %v74 = vld [vmem:[%s1 + $0x8] sm:$0xf]
  %v75 = vld [vmem:[%s1 + $0xc] sm:$0xf]
  %v76 = vld [vmem:[%s1 + $0x10] sm:$0xf]
  %v77 = vld [vmem:[%s1 + $0x14] sm:$0xf]
  %v78 = vld [vmem:[%s1 + $0x18] sm:$0xf]
  %v79 = vld [vmem:[%s1 + $0x1c] sm:$0xf]
  %v80 = vld [vmem:[%s1 + $0x20] sm:$0xf]
  %v81 = vld [vmem:[%s1 + $0x24] sm:$0xf]
  %v82 = vld [vmem:[%s1 + $0x28] sm:$0xf]
  %v83 = vld [vmem:[%s1 + $0x2c] sm:$0xf]
  %v84 = vld [vmem:[%s1 + $0x30] sm:$0xf]
  %v85 = vld [vmem:[%s1 + $0x34] sm:$0xf]
  %v86 = vld [vmem:[%s1 + $0x38] sm:$0xf]
  %v87 = vld [vmem:[%s1 + $0x3c] sm:$0xf]
  %v88 = vld [vmem:[%s1 + $0x40] sm:$0xf]
  %v89 = vld [vmem:[%s1 + $0x44] sm:$0xf]
  %v90 = vld [vmem:[%s1 + $0x48] sm:$0xf]
  %v91 = vld [vmem:[%s1 + $0x4c] sm:$0xf]
  %v92 = vld [vmem:[%s1 + $0x50] sm:$0xf]
  %v93 = vld [vmem:[%s1 + $0x54] sm:$0xf]
  %v94 = vld [vmem:[%s1 + $0x58] sm:$0xf]
  %v95 = vld [vmem:[%s1 + $0x5c] sm:$0xf]
  %v120 = vunpack.c.l.b16 %v72
  %v121 = vunpack.c.l.b16 %v73
  %v122 = vunpack.c.l.b16 %v74
  %v123 = vunpack.c.l.b16 %v75
  %v124 = vunpack.c.l.b16 %v76
  %v125 = vunpack.c.l.b16 %v77
  %v126 = vunpack.c.l.b16 %v78
  %v127 = vunpack.c.l.b16 %v79
  %v128 = vunpack.c.l.b16 %v80
  %v129 = vunpack.c.l.b16 %v81
  %v130 = vunpack.c.l.b16 %v82
  %v131 = vunpack.c.l.b16 %v83
  %v132 = vunpack.c.l.b16 %v84
  %v133 = vunpack.c.l.b16 %v85
  %v134 = vunpack.c.l.b16 %v86
  %v135 = vunpack.c.l.b16 %v87
  %v136 = vunpack.c.l.b16 %v88
  %v137 = vunpack.c.l.b16 %v89
  %v138 = vunpack.c.l.b16 %v90
  %v139 = vunpack.c.l.b16 %v91
  %v140 = vunpack.c.l.b16 %v92
  %v141 = vunpack.c.l.b16 %v93
  %v142 = vunpack.c.l.b16 %v94
  %v143 = vunpack.c.l.b16 %v95
  %v144 = vpack.c.b16 %v121, %v120
  %v145 = vpack.c.b16 %v123, %v122
  %v146 = vpack.c.b16 %v125, %v124
  %v147 = vpack.c.b16 %v127, %v126
  %v148 = vpack.c.b16 %v129, %v128
  %v149 = vpack.c.b16 %v131, %v130
  %v150 = vpack.c.b16 %v133, %v132
  %v151 = vpack.c.b16 %v135, %v134
  %v152 = vpack.c.b16 %v137, %v136
  %v153 = vpack.c.b16 %v139, %v138
  %v154 = vpack.c.b16 %v141, %v140
  %v155 = vpack.c.b16 %v143, %v142
  %v169 = vsel %vm67, %v71, 0
  %171 = vmatprep.subr.bf16.mxu0 0
  %172 = vmatpush1.bf16.msra.mxu0 %v144
  %173 = vmatprep.subr.bf16.mxu0 0
  %174 = vmatpush1.bf16.msra.mxu0 %v145
  %175 = vmatprep.subr.bf16.mxu0 0
  %176 = vmatpush1.bf16.msra.mxu0 %v146
  %177 = vmatprep.subr.bf16.mxu0 0
  %178 = vmatpush1.bf16.msra.mxu0 %v147
  %179 = vmatprep.subr.bf16.mxu0 0
  %180 = vmatpush1.bf16.msra.mxu0 %v148
  %181 = vmatprep.subr.bf16.mxu0 0
  %182 = vmatpush1.bf16.msra.mxu0 %v149
  %183 = vmatprep.subr.bf16.mxu0 0
  %184 = vmatpush1.bf16.msra.mxu0 %v150
  %185 = vmatprep.subr.bf16.mxu0 0
  %186 = vmatpush1.bf16.msra.mxu0 %v151
  %187 = vmatprep.subr.bf16.mxu0 0
  %188 = vmatpush1.bf16.msra.mxu0 %v152
  %189 = vmatprep.subr.bf16.mxu0 0
  %190 = vmatpush1.bf16.msra.mxu0 %v153
  %191 = vmatprep.subr.bf16.mxu0 0
  %192 = vmatpush1.bf16.msra.mxu0 %v154
  %193 = vmatprep.subr.bf16.mxu0 0
  %194 = vmatpush1.bf16.msra.mxu0 %v155
  %195 = vmatprep.subr.bf16.mxu0 0
  %196 = vmatpush1.bf16.msra.mxu0 0
  %197 = vmatprep.subr.bf16.mxu0 0
  %198 = vmatpush1.bf16.msra.mxu0 0
  %199 = vmatprep.subr.bf16.mxu0 0
  %200 = vmatpush1.bf16.msra.mxu0 0
  %201 = vmatprep.subr.bf16.mxu0 0
  %202 = vmatpush1.bf16.msra.mxu0 0
  %203 = vmatprep.mubr.bf16.mxu0 %v169
  %204 = vmatmul.mubr.bf16.gmra.mrb[0].mxu0 %v70
  %v205 = vpop.f32.mrb[0].mxu0
  %v206 = vadd.f32 0.0, %v205
  %v207 = vpop.f32.mrb[0].mxu0
  %v208 = vpop.f32.mrb[0].mxu0
  %v209 = vadd.f32 0.0, %v208
  %v210 = vpop.f32.mrb[0].mxu0
  %211 = vdwg.mxu0
  %v212 = vld [vmem:[%s0 + $0x10] sm:$0xff]
  %v213 = vld [vmem:[%s0 + $0x18] sm:$0x3f]
  %v214 = vld [vmem:[%s0 + $0x11] sm:$0xff]
  %v215 = vld [vmem:[%s0 + $0x19] sm:$0x3f]
  %v216 = vld [vmem:[%s0 + $0x12] sm:$0xff]
  %v217 = vld [vmem:[%s0 + $0x1a] sm:$0x3f]
  %220 = vrot.lane.b32.xlu0 %v214, 64
  %v221 = vpop.permute.xlu0 %220
  %222 = vrot.lane.b32.xlu0 %v215, 64
  %v223 = vpop.permute.xlu0 %222
  %v226 = vsel %vm67, %v212, %v221
  %v227 = vsel %vm67, %v213, %v223
  %v228 = vpack.c.bf16 %v227, %v226
  %v229 = vpack.c.bf16 %v217, %v216
  %v231 = vsel %vm67, %v229, 0
  %233 = vmatprep.subr.bf16.mxu0 0
  %234 = vmatpush1.bf16.msra.mxu0 %v144
  %235 = vmatprep.subr.bf16.mxu0 0
  %236 = vmatpush1.bf16.msra.mxu0 %v145
  %237 = vmatprep.subr.bf16.mxu0 0
  %238 = vmatpush1.bf16.msra.mxu0 %v146
  %239 = vmatprep.subr.bf16.mxu0 0
  %240 = vmatpush1.bf16.msra.mxu0 %v147
  %241 = vmatprep.subr.bf16.mxu0 0
  %242 = vmatpush1.bf16.msra.mxu0 %v148
  %243 = vmatprep.subr.bf16.mxu0 0
  %244 = vmatpush1.bf16.msra.mxu0 %v149
  %245 = vmatprep.subr.bf16.mxu0 0
  %246 = vmatpush1.bf16.msra.mxu0 %v150
  %247 = vmatprep.subr.bf16.mxu0 0
  %248 = vmatpush1.bf16.msra.mxu0 %v151
  %249 = vmatprep.subr.bf16.mxu0 0
  %250 = vmatpush1.bf16.msra.mxu0 %v152
  %251 = vmatprep.subr.bf16.mxu0 0
  %252 = vmatpush1.bf16.msra.mxu0 %v153
  %253 = vmatprep.subr.bf16.mxu0 0
  %254 = vmatpush1.bf16.msra.mxu0 %v154
  %255 = vmatprep.subr.bf16.mxu0 0
  %256 = vmatpush1.bf16.msra.mxu0 %v155
  %257 = vmatprep.subr.bf16.mxu0 0
  %258 = vmatpush1.bf16.msra.mxu0 0
  %259 = vmatprep.subr.bf16.mxu0 0
  %260 = vmatpush1.bf16.msra.mxu0 0
  %261 = vmatprep.subr.bf16.mxu0 0
  %262 = vmatpush1.bf16.msra.mxu0 0
  %263 = vmatprep.subr.bf16.mxu0 0
  %264 = vmatpush1.bf16.msra.mxu0 0
  %265 = vmatprep.mubr.bf16.mxu0 %v231
  %266 = vmatmul.mubr.bf16.gmra.mrb[0].mxu0 %v228
  %v267 = vpop.f32.mrb[0].mxu0
  %v268 = vadd.f32 0.0, %v267
  %v269 = vpop.f32.mrb[0].mxu0
  %v270 = vpop.f32.mrb[0].mxu0
  %v271 = vadd.f32 0.0, %v270
  %v272 = vpop.f32.mrb[0].mxu0
  %273 = vdwg.mxu0
  %vm274 = vcmask 916480
  %v275 = vsel %vm274, %v206, 0.0
  %vm276 = vcmask 914432
  %v277 = vsel %vm276, %v209, 0.0
  %v278 = vadd.f32 %v275, %v277
  %v279 = vrot.slane %v278, 4
  %v280 = vadd.f32 %v278, %v279
  %v281 = vrot.slane %v280, 2
  %v282 = vadd.f32 %v280, %v281
  %v283 = vrot.slane %v282, 1
  %v284 = vadd.f32 %v282, %v283
  %v285 = vmul.f32 %v206, %v206
  %v286 = vmul.f32 %v209, %v209
  %v287 = vsel %vm274, %v285, 0.0
  %v288 = vsel %vm276, %v286, 0.0
  %v289 = vadd.f32 %v287, %v288
  %v290 = vrot.slane %v289, 4
  %v291 = vadd.f32 %v289, %v290
  %v292 = vrot.slane %v291, 2
  %v293 = vadd.f32 %v291, %v292
  %v294 = vrot.slane %v293, 1
  %v295 = vadd.f32 %v293, %v294
  %v296 = vsel %vm274, %v268, 0.0
  %v297 = vsel %vm276, %v271, 0.0
  %v298 = vadd.f32 %v296, %v297
  %v299 = vrot.slane %v298, 4
  %v300 = vadd.f32 %v298, %v299
  %v301 = vrot.slane %v300, 2
  %v302 = vadd.f32 %v300, %v301
  %v303 = vrot.slane %v302, 1
  %v304 = vadd.f32 %v302, %v303
  %v305 = vmul.f32 %v268, %v268
  %v306 = vmul.f32 %v271, %v271
  %v307 = vsel %vm274, %v305, 0.0
  %v308 = vsel %vm276, %v306, 0.0
  %v309 = vadd.f32 %v307, %v308
  %v310 = vrot.slane %v309, 4
  %v311 = vadd.f32 %v309, %v310
  %v312 = vrot.slane %v311, 2
  %v313 = vadd.f32 %v311, %v312
  %v314 = vrot.slane %v313, 1
  %v315 = vadd.f32 %v313, %v314
  %v316 = vadd.f32 %v284, %v304
  %v317 = vadd.f32 %v295, %v315
  %vm318 = vcmask 1040384
  %v319 = vsel %vm318, %v316, %v317
  %v320 = vpack.c.bf16 %v319, %v319
  %v321 = vld [vmem:[%s2] sm:$0xf]
  %v322 = vld [vmem:[%s2 + $0x4] sm:$0xf]
  %v323 = vld [vmem:[%s2 + $0x8] sm:$0xf]
  %v324 = vld [vmem:[%s2 + $0xc] sm:$0xf]
  %v325 = vld [vmem:[%s2 + $0x10] sm:$0xf]
  %v326 = vld [vmem:[%s2 + $0x14] sm:$0xf]
  %v327 = vld [vmem:[%s2 + $0x18] sm:$0xf]
  %v328 = vld [vmem:[%s2 + $0x1c] sm:$0xf]
  %v329 = vld [vmem:[%s2 + $0x20] sm:$0xf]
  %v330 = vld [vmem:[%s2 + $0x24] sm:$0xf]
  %v331 = vld [vmem:[%s2 + $0x28] sm:$0xf]
  %v332 = vld [vmem:[%s2 + $0x2c] sm:$0xf]
  %v333 = vld [vmem:[%s2 + $0x30] sm:$0xf]
  %v334 = vld [vmem:[%s2 + $0x34] sm:$0xf]
  %v349 = vunpack.c.l.b16 %v321
  %v350 = vunpack.c.l.b16 %v322
  %v351 = vunpack.c.l.b16 %v323
  %v352 = vunpack.c.l.b16 %v324
  %v353 = vunpack.c.l.b16 %v325
  %v354 = vunpack.c.l.b16 %v326
  %v355 = vunpack.c.l.b16 %v327
  %v356 = vunpack.c.l.b16 %v328
  %v357 = vunpack.c.l.b16 %v329
  %v358 = vunpack.c.l.b16 %v330
  %v359 = vunpack.c.l.b16 %v331
  %v360 = vunpack.c.l.b16 %v332
  %v361 = vunpack.c.l.b16 %v333
  %v362 = vunpack.c.l.b16 %v334
  %v363 = vpack.c.b16 %v350, %v349
  %v364 = vpack.c.b16 %v352, %v351
  %v365 = vpack.c.b16 %v354, %v353
  %v366 = vpack.c.b16 %v356, %v355
  %v367 = vpack.c.b16 %v358, %v357
  %v368 = vpack.c.b16 %v360, %v359
  %v369 = vpack.c.b16 %v362, %v361
  %v378 = vsel %vm274, %v320, 0
  %380 = vmatprep.subr.bf16.mxu0 0
  %381 = vmatpush1.bf16.msra.mxu0 %v363
  %382 = vmatprep.subr.bf16.mxu0 0
  %383 = vmatpush1.bf16.msra.mxu0 %v364
  %384 = vmatprep.subr.bf16.mxu0 0
  %385 = vmatpush1.bf16.msra.mxu0 %v365
  %386 = vmatprep.subr.bf16.mxu0 0
  %387 = vmatpush1.bf16.msra.mxu0 %v366
  %388 = vmatprep.subr.bf16.mxu0 0
  %389 = vmatpush1.bf16.msra.mxu0 %v367
  %390 = vmatprep.subr.bf16.mxu0 0
  %391 = vmatpush1.bf16.msra.mxu0 %v368
  %392 = vmatprep.subr.bf16.mxu0 0
  %393 = vmatpush1.bf16.msra.mxu0 %v369
  %394 = vmatprep.subr.bf16.mxu0 0
  %395 = vmatpush1.bf16.msra.mxu0 0
  %396 = vmatprep.subr.bf16.mxu0 0
  %397 = vmatpush1.bf16.msra.mxu0 0
  %398 = vmatprep.subr.bf16.mxu0 0
  %399 = vmatpush1.bf16.msra.mxu0 0
  %400 = vmatprep.subr.bf16.mxu0 0
  %401 = vmatpush1.bf16.msra.mxu0 0
  %402 = vmatprep.subr.bf16.mxu0 0
  %403 = vmatpush1.bf16.msra.mxu0 0
  %404 = vmatprep.subr.bf16.mxu0 0
  %405 = vmatpush1.bf16.msra.mxu0 0
  %406 = vmatprep.subr.bf16.mxu0 0
  %407 = vmatpush1.bf16.msra.mxu0 0
  %408 = vmatprep.subr.bf16.mxu0 0
  %409 = vmatpush1.bf16.msra.mxu0 0
  %410 = vmatprep.subr.bf16.mxu0 0
  %411 = vmatpush1.bf16.msra.mxu0 0
  %412 = vmatprep.mubr.bf16.mxu0 0
  %413 = vmatmul.mubr.bf16.gmra.mrb[0].mxu0 %v378
  %v414 = vpop.f32.mrb[0].mxu0
  %v415 = vadd.f32 0.0, %v414
  %v416 = vpop.f32.mrb[0].mxu0
  %v417 = vpop.f32.mrb[0].mxu0
  %v418 = vpop.f32.mrb[0].mxu0
  %419 = vdwg.mxu0
  %v420 = vmul.f32 %v415, 0.0025510204
  %v421 = vmul.f32 %v420, %v420
  %v423 = vrot.slane %v421, 7
  %v425 = vsub.f32 %v420, %v423
  %v426 = vld [vmem:[%s3] sm:$0x1]
  %v427 = vadd.f32 %v425, 1e-05
  %v428 = vrsqrt.pop %v427
  %v431 = vunpack.c.l.s4 1966171168
  %v432 = vunpack.c.0.s8 %v431
  %v433 = vlaneseq
  %v434 = vshrl.u32 %v433, 7
  %v435 = vsub.s32 %v432, %v434
  %v436 = vrot.slane %v428, %v435
  %v437 = vcombine.high %v436, %v436
  %v439 = vunpack.c.l.s4 1966171168
  %v440 = vunpack.c.0.s8 %v439
  %v441 = vlaneseq
  %v442 = vshrl.u32 %v441, 7
  %v443 = vsub.s32 %v440, %v442
  %v444 = vrot.slane %v437, %v443
  %v446 = vmul.f32 %v426, %v444
  %v447 = vld [vmem:[%s4] sm:$0x1]
  %v448 = vmul.f32 %v420, %v446
  %v449 = vsub.f32 %v447, %v448
  %v451 = vlaneseq
  %v452 = vshrl.u32 %v451, 7
  %v453 = vsub.s32 0, %v452
  %v454 = vrot.slane %v446, %v453
  %v456 = vmul.f32 %v206, %v454
  %v457 = vmul.f32 %v209, %v454
  %v459 = vlaneseq
  %v460 = vshrl.u32 %v459, 7
  %v461 = vsub.s32 0, %v460
  %v462 = vrot.slane %v449, %v461
  %v464 = vadd.f32 %v456, %v462
  %v465 = vadd.f32 %v457, %v462
  %v466 = vmul.f32 %v464, 0.2
  %v467 = vmul.f32 %v465, 0.2
  %v468 = vmax.f32 %v464, %v466
  %v469 = vmax.f32 %v465, %v467
  %v470 = vmul.f32 %v268, %v454
  %v471 = vmul.f32 %v271, %v454
  %v472 = vadd.f32 %v470, %v462
  %v473 = vadd.f32 %v471, %v462
  %v474 = vmul.f32 %v472, 0.2
  %v475 = vmul.f32 %v473, 0.2
  %v476 = vmax.f32 %v472, %v474
  %v477 = vmax.f32 %v473, %v475
  %478 = vst.msk [vmem:[#allocation2] sm:$0xff] %vm274, %v468
  %479 = vst.msk [vmem:[#allocation2 + $0x8] sm:$0x3f] %vm276, %v469
  %480 = vst.msk [vmem:[#allocation2 + $0xe] sm:$0xff] %vm274, %v476
  %481 = vst.msk [vmem:[#allocation2 + $0x16] sm:$0x3f] %vm276, %v477
  %v482 = vld [vmem:[#allocation2] ss:$2 sm:$0x3f]
  %s483 = scalar_lea.vmem [#allocation2], 1
  %v484 = vld [vmem:[%s483] ss:$2 sm:$0x3f]
  %s485 = scalar_lea.vmem [#allocation2], 2
  %v486 = vld [vmem:[%s485] ss:$2 sm:$0x3f]
  %488 = vrot.lane.b32.xlu0 %v484, 112
  %v489 = vpop.permute.xlu0 %488
  %492 = vrot.lane.b32.xlu0 %v486, 96
  %v493 = vpop.permute.xlu0 %492
  %v495 = vsel %vm274, %v482, %v489
  %vm496 = vcmask 785408
  %v497 = vsel %vm496, %v489, %v493
  %v498 = vpack.c.bf16 %v495, %v495
  %v499 = vpack.c.bf16 %v497, %v497
  %v500 = vpack.c.bf16 %v493, %v493
  %v501 = vld [vmem:[%s5] sm:$0xf]
  %v502 = vld [vmem:[%s5 + $0x4] sm:$0xf]
  %v503 = vld [vmem:[%s5 + $0x8] sm:$0xf]
  %v504 = vld [vmem:[%s5 + $0xc] sm:$0xf]
  %v505 = vld [vmem:[%s5 + $0x10] sm:$0xf]
  %v506 = vld [vmem:[%s5 + $0x14] sm:$0xf]
  %v507 = vld [vmem:[%s5 + $0x18] sm:$0xf]
  %v508 = vld [vmem:[%s5 + $0x1c] sm:$0xf]
  %v509 = vld [vmem:[%s5 + $0x20] sm:$0xf]
  %v510 = vld [vmem:[%s5 + $0x24] sm:$0xf]
  %v511 = vld [vmem:[%s5 + $0x28] sm:$0xf]
  %v512 = vld [vmem:[%s5 + $0x2c] sm:$0xf]
  %v513 = vld [vmem:[%s5 + $0x30] sm:$0xf]
  %v514 = vld [vmem:[%s5 + $0x34] sm:$0xf]
  %v515 = vld [vmem:[%s5 + $0x38] sm:$0xf]
  %v516 = vld [vmem:[%s5 + $0x3c] sm:$0xf]
  %v517 = vld [vmem:[%s5 + $0x40] sm:$0xf]
  %v518 = vld [vmem:[%s5 + $0x44] sm:$0xf]
  %v519 = vld [vmem:[%s5 + $0x48] sm:$0xf]
  %v520 = vld [vmem:[%s5 + $0x4c] sm:$0xf]
  %v521 = vld [vmem:[%s5 + $0x50] sm:$0xf]
  %v522 = vld [vmem:[%s5 + $0x54] sm:$0xf]
  %v523 = vld [vmem:[%s5 + $0x58] sm:$0xf]
  %v524 = vld [vmem:[%s5 + $0x5c] sm:$0xf]
  %v525 = vld [vmem:[%s5 + $0x60] sm:$0xf]
  %v526 = vld [vmem:[%s5 + $0x64] sm:$0xf]
  %v527 = vld [vmem:[%s5 + $0x68] sm:$0xf]
  %v528 = vld [vmem:[%s5 + $0x6c] sm:$0xf]
  %v529 = vld [vmem:[%s5 + $0x70] sm:$0xf]
  %v530 = vld [vmem:[%s5 + $0x74] sm:$0xf]
  %v531 = vld [vmem:[%s5 + $0x78] sm:$0xf]
  %v532 = vld [vmem:[%s5 + $0x7c] sm:$0xf]
  %v533 = vld [vmem:[%s5 + $0x80] sm:$0xf]
  %v534 = vld [vmem:[%s5 + $0x84] sm:$0xf]
  %v535 = vld [vmem:[%s5 + $0x88] sm:$0xf]
  %v536 = vld [vmem:[%s5 + $0x8c] sm:$0xf]
  %v537 = vld [vmem:[%s5 + $0x90] sm:$0xf]
  %v538 = vld [vmem:[%s5 + $0x94] sm:$0xf]
  %v539 = vld [vmem:[%s5 + $0x98] sm:$0xf]
  %v540 = vld [vmem:[%s5 + $0x9c] sm:$0xf]
  %v541 = vld [vmem:[%s5 + $0xa0] sm:$0xf]
  %v542 = vld [vmem:[%s5 + $0xa4] sm:$0xf]
  %v585 = vunpack.c.l.b16 %v501
  %v586 = vunpack.c.l.b16 %v502
  %v587 = vunpack.c.l.b16 %v503
  %v588 = vunpack.c.l.b16 %v504
  %v589 = vunpack.c.l.b16 %v505
  %v590 = vunpack.c.l.b16 %v506
  %v591 = vunpack.c.l.b16 %v507
  %v592 = vunpack.c.l.b16 %v508
  %v593 = vunpack.c.l.b16 %v509
  %v594 = vunpack.c.l.b16 %v510
  %v595 = vunpack.c.l.b16 %v511
  %v596 = vunpack.c.l.b16 %v512
  %v597 = vunpack.c.l.b16 %v513
  %v598 = vunpack.c.l.b16 %v514
  %v599 = vunpack.c.l.b16 %v515
  %v600 = vunpack.c.l.b16 %v516
  %v601 = vunpack.c.l.b16 %v517
  %v602 = vunpack.c.l.b16 %v518
  %v603 = vunpack.c.l.b16 %v519
  %v604 = vunpack.c.l.b16 %v520
  %v605 = vunpack.c.l.b16 %v521
  %v606 = vunpack.c.l.b16 %v522
  %v607 = vunpack.c.l.b16 %v523
  %v608 = vunpack.c.l.b16 %v524
  %v609 = vunpack.c.l.b16 %v525
  %v610 = vunpack.c.l.b16 %v526
  %v611 = vunpack.c.l.b16 %v527
  %v612 = vunpack.c.l.b16 %v528
  %v613 = vunpack.c.l.b16 %v529
  %v614 = vunpack.c.l.b16 %v530
  %v615 = vunpack.c.l.b16 %v531
  %v616 = vunpack.c.l.b16 %v532
  %v617 = vunpack.c.l.b16 %v533
  %v618 = vunpack.c.l.b16 %v534
  %v619 = vunpack.c.l.b16 %v535
  %v620 = vunpack.c.l.b16 %v536
  %v621 = vunpack.c.l.b16 %v537
  %v622 = vunpack.c.l.b16 %v538
  %v623 = vunpack.c.l.b16 %v539
  %v624 = vunpack.c.l.b16 %v540
  %v625 = vunpack.c.l.b16 %v541
  %v626 = vunpack.c.l.b16 %v542
  %v627 = vpack.c.b16 %v586, %v585
  %v628 = vpack.c.b16 %v588, %v587
  %v629 = vpack.c.b16 %v590, %v589
  %v630 = vpack.c.b16 %v592, %v591
  %v631 = vpack.c.b16 %v594, %v593
  %v632 = vpack.c.b16 %v596, %v595
  %v633 = vpack.c.b16 %v598, %v597
  %v634 = vpack.c.b16 %v600, %v599
  %v635 = vpack.c.b16 %v602, %v601
  %v636 = vpack.c.b16 %v604, %v603
  %v637 = vpack.c.b16 %v606, %v605
  %v638 = vpack.c.b16 %v608, %v607
  %v639 = vpack.c.b16 %v610, %v609
  %v640 = vpack.c.b16 %v612, %v611
  %v641 = vpack.c.b16 %v614, %v613
  %v642 = vpack.c.b16 %v616, %v615
  %v643 = vpack.c.b16 %v618, %v617
  %v644 = vpack.c.b16 %v620, %v619
  %v645 = vpack.c.b16 %v622, %v621
  %v646 = vpack.c.b16 %v624, %v623
  %v647 = vpack.c.b16 %v626, %v625
  %vm669 = vcmask 654336
  %v671 = vsel %vm669, %v500, 0
  %673 = vmatprep.subr.bf16.mxu0 0
  %674 = vmatpush1.bf16.msra.mxu0 %v627
  %675 = vmatprep.subr.bf16.mxu0 0
  %676 = vmatpush1.bf16.msra.mxu0 %v628
  %677 = vmatprep.subr.bf16.mxu0 0
  %678 = vmatpush1.bf16.msra.mxu0 %v629
  %679 = vmatprep.subr.bf16.mxu0 0
  %680 = vmatpush1.bf16.msra.mxu0 %v630
  %681 = vmatprep.subr.bf16.mxu0 0
  %682 = vmatpush1.bf16.msra.mxu0 %v631
  %683 = vmatprep.subr.bf16.mxu0 0
  %684 = vmatpush1.bf16.msra.mxu0 %v632
  %685 = vmatprep.subr.bf16.mxu0 0
  %686 = vmatpush1.bf16.msra.mxu0 %v633
  %687 = vmatprep.subr.bf16.mxu0 0
  %688 = vmatpush1.bf16.msra.mxu0 %v634
  %689 = vmatprep.subr.bf16.mxu0 0
  %690 = vmatpush1.bf16.msra.mxu0 %v635
  %691 = vmatprep.subr.bf16.mxu0 0
  %692 = vmatpush1.bf16.msra.mxu0 %v636
  %693 = vmatprep.subr.bf16.mxu0 0
  %694 = vmatpush1.bf16.msra.mxu0 %v637
  %695 = vmatprep.subr.bf16.mxu0 0
  %696 = vmatpush1.bf16.msra.mxu0 %v638
  %697 = vmatprep.subr.bf16.mxu0 0
  %698 = vmatpush1.bf16.msra.mxu0 %v639
  %699 = vmatprep.subr.bf16.mxu0 0
  %700 = vmatpush1.bf16.msra.mxu0 %v640
  %701 = vmatprep.subr.bf16.mxu0 0
  %702 = vmatpush1.bf16.msra.mxu0 %v641
  %703 = vmatprep.subr.bf16.mxu0 0
  %704 = vmatpush1.bf16.msra.mxu0 %v642
  %705 = vmatprep.mubr.bf16.mxu0 %v499
  %706 = vmatmul.mubr.bf16.gmra.mrb[0].mxu0 %v498
  %v707 = vpop.f32.mrb[0].mxu0
  %v708 = vadd.f32 0.0, %v707
  %v709 = vpop.f32.mrb[0].mxu0
  %v710 = vpop.f32.mrb[0].mxu0
  %v711 = vpop.f32.mrb[0].mxu0
  %712 = vdwg.mxu0
  %713 = vmatprep.subr.bf16.mxu0 0
  %714 = vmatpush1.bf16.msra.mxu0 %v643
  %715 = vmatprep.subr.bf16.mxu0 0
  %716 = vmatpush1.bf16.msra.mxu0 %v644
  %717 = vmatprep.subr.bf16.mxu0 0
  %718 = vmatpush1.bf16.msra.mxu0 %v645
  %719 = vmatprep.subr.bf16.mxu0 0
  %720 = vmatpush1.bf16.msra.mxu0 %v646
  %721 = vmatprep.subr.bf16.mxu0 0
  %722 = vmatpush1.bf16.msra.mxu0 %v647
  %723 = vmatprep.subr.bf16.mxu0 0
  %724 = vmatpush1.bf16.msra.mxu0 0
  %725 = vmatprep.subr.bf16.mxu0 0
  %726 = vmatpush1.bf16.msra.mxu0 0
  %727 = vmatprep.subr.bf16.mxu0 0
  %728 = vmatpush1.bf16.msra.mxu0 0
  %729 = vmatprep.subr.bf16.mxu0 0
  %730 = vmatpush1.bf16.msra.mxu0 0
  %731 = vmatprep.subr.bf16.mxu0 0
  %732 = vmatpush1.bf16.msra.mxu0 0
  %733 = vmatprep.subr.bf16.mxu0 0
  %734 = vmatpush1.bf16.msra.mxu0 0
  %735 = vmatprep.subr.bf16.mxu0 0
  %736 = vmatpush1.bf16.msra.mxu0 0
  %737 = vmatprep.subr.bf16.mxu0 0
  %738 = vmatpush1.bf16.msra.mxu0 0
  %739 = vmatprep.subr.bf16.mxu0 0
  %740 = vmatpush1.bf16.msra.mxu0 0
  %741 = vmatprep.subr.bf16.mxu0 0
  %742 = vmatpush1.bf16.msra.mxu0 0
  %743 = vmatprep.subr.bf16.mxu0 0
  %744 = vmatpush1.bf16.msra.mxu0 0
  %745 = vmatprep.mubr.bf16.mxu0 0
  %746 = vmatmul.mubr.bf16.gmra.mrb[0].mxu0 %v671
  %v747 = vpop.f32.mrb[0].mxu0
  %v748 = vadd.f32 %v708, %v747
  %v749 = vpop.f32.mrb[0].mxu0
  %v750 = vpop.f32.mrb[0].mxu0
  %v751 = vpop.f32.mrb[0].mxu0
  %752 = vdwg.mxu0
  %s753 = scalar_lea.vmem [#allocation2], 14
  %v754 = vld [vmem:[%s753] ss:$2 sm:$0x3f]
  %s755 = scalar_lea.vmem [#allocation2], 15
  %v756 = vld [vmem:[%s755] ss:$2 sm:$0x3f]
  %s757 = scalar_lea.vmem [#allocation2], 16
  %v758 = vld [vmem:[%s757] ss:$2 sm:$0x3f]
  %760 = vrot.lane.b32.xlu0 %v756, 112
  %v761 = vpop.permute.xlu0 %760
  %764 = vrot.lane.b32.xlu0 %v758, 96
  %v765 = vpop.permute.xlu0 %764
  %v767 = vsel %vm274, %v754, %v761
  %v768 = vsel %vm496, %v761, %v765
  %v769 = vpack.c.bf16 %v767, %v767
  %v770 = vpack.c.bf16 %v768, %v768
  %v771 = vpack.c.bf16 %v765, %v765
  %v773 = vsel %vm669, %v771, 0
  %775 = vmatprep.subr.bf16.mxu0 0
  %776 = vmatpush1.bf16.msra.mxu0 %v627
  %777 = vmatprep.subr.bf16.mxu0 0
  %778 = vmatpush1.bf16.msra.mxu0 %v628
  %779 = vmatprep.subr.bf16.mxu0 0
  %780 = vmatpush1.bf16.msra.mxu0 %v629
  %781 = vmatprep.subr.bf16.mxu0 0
  %782 = vmatpush1.bf16.msra.mxu0 %v630
  %783 = vmatprep.subr.bf16.mxu0 0
  %784 = vmatpush1.bf16.msra.mxu0 %v631
  %785 = vmatprep.subr.bf16.mxu0 0
  %786 = vmatpush1.bf16.msra.mxu0 %v632
  %787 = vmatprep.subr.bf16.mxu0 0
  %788 = vmatpush1.bf16.msra.mxu0 %v633
  %789 = vmatprep.subr.bf16.mxu0 0
  %790 = vmatpush1.bf16.msra.mxu0 %v634
  %791 = vmatprep.subr.bf16.mxu0 0
  %792 = vmatpush1.bf16.msra.mxu0 %v635
  %793 = vmatprep.subr.bf16.mxu0 0
  %794 = vmatpush1.bf16.msra.mxu0 %v636
  %795 = vmatprep.subr.bf16.mxu0 0
  %796 = vmatpush1.bf16.msra.mxu0 %v637
  %797 = vmatprep.subr.bf16.mxu0 0
  %798 = vmatpush1.bf16.msra.mxu0 %v638
  %799 = vmatprep.subr.bf16.mxu0 0
  %800 = vmatpush1.bf16.msra.mxu0 %v639
  %801 = vmatprep.subr.bf16.mxu0 0
  %802 = vmatpush1.bf16.msra.mxu0 %v640
  %803 = vmatprep.subr.bf16.mxu0 0
  %804 = vmatpush1.bf16.msra.mxu0 %v641
  %805 = vmatprep.subr.bf16.mxu0 0
  %806 = vmatpush1.bf16.msra.mxu0 %v642
  %807 = vmatprep.mubr.bf16.mxu0 %v770
  %808 = vmatmul.mubr.bf16.gmra.mrb[0].mxu0 %v769
  %v809 = vpop.f32.mrb[0].mxu0
  %v810 = vadd.f32 0.0, %v809
  %v811 = vpop.f32.mrb[0].mxu0
  %v812 = vpop.f32.mrb[0].mxu0
  %v813 = vpop.f32.mrb[0].mxu0
  %814 = vdwg.mxu0
  %815 = vmatprep.subr.bf16.mxu0 0
  %816 = vmatpush1.bf16.msra.mxu0 %v643
  %817 = vmatprep.subr.bf16.mxu0 0
  %818 = vmatpush1.bf16.msra.mxu0 %v644
  %819 = vmatprep.subr.bf16.mxu0 0
  %820 = vmatpush1.bf16.msra.mxu0 %v645
  %821 = vmatprep.subr.bf16.mxu0 0
  %822 = vmatpush1.bf16.msra.mxu0 %v646
  %823 = vmatprep.subr.bf16.mxu0 0
  %824 = vmatpush1.bf16.msra.mxu0 %v647
  %825 = vmatprep.subr.bf16.mxu0 0
  %826 = vmatpush1.bf16.msra.mxu0 0
  %827 = vmatprep.subr.bf16.mxu0 0
  %828 = vmatpush1.bf16.msra.mxu0 0
  %829 = vmatprep.subr.bf16.mxu0 0
  %830 = vmatpush1.bf16.msra.mxu0 0
  %831 = vmatprep.subr.bf16.mxu0 0
  %832 = vmatpush1.bf16.msra.mxu0 0
  %833 = vmatprep.subr.bf16.mxu0 0
  %834 = vmatpush1.bf16.msra.mxu0 0
  %835 = vmatprep.subr.bf16.mxu0 0
  %836 = vmatpush1.bf16.msra.mxu0 0
  %837 = vmatprep.subr.bf16.mxu0 0
  %838 = vmatpush1.bf16.msra.mxu0 0
  %839 = vmatprep.subr.bf16.mxu0 0
  %840 = vmatpush1.bf16.msra.mxu0 0
  %841 = vmatprep.subr.bf16.mxu0 0
  %842 = vmatpush1.bf16.msra.mxu0 0
  %843 = vmatprep.subr.bf16.mxu0 0
  %844 = vmatpush1.bf16.msra.mxu0 0
  %845 = vmatprep.subr.bf16.mxu0 0
  %846 = vmatpush1.bf16.msra.mxu0 0
  %847 = vmatprep.mubr.bf16.mxu0 0
  %848 = vmatmul.mubr.bf16.gmra.mrb[0].mxu0 %v773
  %v849 = vpop.f32.mrb[0].mxu0
  %v850 = vadd.f32 %v810, %v849
  %v851 = vpop.f32.mrb[0].mxu0
  %v852 = vpop.f32.mrb[0].mxu0
  %v853 = vpop.f32.mrb[0].mxu0
  %854 = vdwg.mxu0
  %vm855 = vcmask 783360
  %v856 = vsel %vm855, %v748, 0.0
  %v857 = vrot.slane %v856, 4
  %v858 = vadd.f32 %v856, %v857
  %v859 = vrot.slane %v858, 2
  %v860 = vadd.f32 %v858, %v859
  %v861 = vrot.slane %v860, 1
  %v862 = vadd.f32 %v860, %v861
  %v863 = vmul.f32 %v748, %v748
  %v864 = vsel %vm855, %v863, 0.0
  %v865 = vrot.slane %v864, 4
  %v866 = vadd.f32 %v864, %v865
  %v867 = vrot.slane %v866, 2
  %v868 = vadd.f32 %v866, %v867
  %v869 = vrot.slane %v868, 1
  %v870 = vadd.f32 %v868, %v869
  %v871 = vsel %vm855, %v850, 0.0
  %v872 = vrot.slane %v871, 4
  %v873 = vadd.f32 %v871, %v872
  %v874 = vrot.slane %v873, 2
  %v875 = vadd.f32 %v873, %v874
  %v876 = vrot.slane %v875, 1
  %v877 = vadd.f32 %v875, %v876
  %v878 = vmul.f32 %v850, %v850
  %v879 = vsel %vm855, %v878, 0.0
  %v880 = vrot.slane %v879, 4
  %v881 = vadd.f32 %v879, %v880
  %v882 = vrot.slane %v881, 2
  %v883 = vadd.f32 %v881, %v882
  %v884 = vrot.slane %v883, 1
  %v885 = vadd.f32 %v883, %v884
  %v886 = vadd.f32 %v862, %v877
  %v887 = vadd.f32 %v870, %v885
  %v888 = vsel %vm318, %v886, %v887
  %v889 = vpack.c.bf16 %v888, %v888
  %v890 = vld [vmem:[%s6] sm:$0xf]
  %v891 = vld [vmem:[%s6 + $0x4] sm:$0xf]
  %v892 = vld [vmem:[%s6 + $0x8] sm:$0xf]
  %v893 = vld [vmem:[%s6 + $0xc] sm:$0xf]
  %v894 = vld [vmem:[%s6 + $0x10] sm:$0xf]
  %v895 = vld [vmem:[%s6 + $0x14] sm:$0xf]
  %v896 = vld [vmem:[%s6 + $0x18] sm:$0xf]
  %v897 = vld [vmem:[%s6 + $0x1c] sm:$0xf]
  %v898 = vld [vmem:[%s6 + $0x20] sm:$0xf]
  %v899 = vld [vmem:[%s6 + $0x24] sm:$0xf]
  %v900 = vld [vmem:[%s6 + $0x28] sm:$0xf]
  %v901 = vld [vmem:[%s6 + $0x2c] sm:$0xf]
  %v914 = vunpack.c.l.b16 %v890
  %v915 = vunpack.c.l.b16 %v891
  %v916 = vunpack.c.l.b16 %v892
  %v917 = vunpack.c.l.b16 %v893
  %v918 = vunpack.c.l.b16 %v894
  %v919 = vunpack.c.l.b16 %v895
  %v920 = vunpack.c.l.b16 %v896
  %v921 = vunpack.c.l.b16 %v897
  %v922 = vunpack.c.l.b16 %v898
  %v923 = vunpack.c.l.b16 %v899
  %v924 = vunpack.c.l.b16 %v900
  %v925 = vunpack.c.l.b16 %v901
  %v926 = vpack.c.b16 %v915, %v914
  %v927 = vpack.c.b16 %v917, %v916
  %v928 = vpack.c.b16 %v919, %v918
  %v929 = vpack.c.b16 %v921, %v920
  %v930 = vpack.c.b16 %v923, %v922
  %v931 = vpack.c.b16 %v925, %v924
  %v939 = vsel %vm496, %v889, 0
  %941 = vmatprep.subr.bf16.mxu0 0
  %942 = vmatpush1.bf16.msra.mxu0 %v926
  %943 = vmatprep.subr.bf16.mxu0 0
  %944 = vmatpush1.bf16.msra.mxu0 %v927
  %945 = vmatprep.subr.bf16.mxu0 0
  %946 = vmatpush1.bf16.msra.mxu0 %v928
  %947 = vmatprep.subr.bf16.mxu0 0
  %948 = vmatpush1.bf16.msra.mxu0 %v929
  %949 = vmatprep.subr.bf16.mxu0 0
  %950 = vmatpush1.bf16.msra.mxu0 %v930
  %951 = vmatprep.subr.bf16.mxu0 0
  %952 = vmatpush1.bf16.msra.mxu0 %v931
  %953 = vmatprep.subr.bf16.mxu0 0
  %954 = vmatpush1.bf16.msra.mxu0 0
  %955 = vmatprep.subr.bf16.mxu0 0
  %956 = vmatpush1.bf16.msra.mxu0 0
  %957 = vmatprep.subr.bf16.mxu0 0
  %958 = vmatpush1.bf16.msra.mxu0 0
  %959 = vmatprep.subr.bf16.mxu0 0
  %960 = vmatpush1.bf16.msra.mxu0 0
  %961 = vmatprep.subr.bf16.mxu0 0
  %962 = vmatpush1.bf16.msra.mxu0 0
  %963 = vmatprep.subr.bf16.mxu0 0
  %964 = vmatpush1.bf16.msra.mxu0 0
  %965 = vmatprep.subr.bf16.mxu0 0
  %966 = vmatpush1.bf16.msra.mxu0 0
  %967 = vmatprep.subr.bf16.mxu0 0
  %968 = vmatpush1.bf16.msra.mxu0 0
  %969 = vmatprep.subr.bf16.mxu0 0
  %970 = vmatpush1.bf16.msra.mxu0 0
  %971 = vmatprep.subr.bf16.mxu0 0
  %972 = vmatpush1.bf16.msra.mxu0 0
  %973 = vmatprep.mubr.bf16.mxu0 0
  %974 = vmatmul.mubr.bf16.gmra.mrb[0].mxu0 %v939
  %v975 = vpop.f32.mrb[0].mxu0
  %v976 = vadd.f32 0.0, %v975
  %v977 = vpop.f32.mrb[0].mxu0
  %v978 = vpop.f32.mrb[0].mxu0
  %v979 = vpop.f32.mrb[0].mxu0
  %980 = vdwg.mxu0
  %v981 = vmul.f32 %v976, 0.013888889
  %v982 = vmul.f32 %v981, %v981
  %v984 = vrot.slane %v982, 7
  %v986 = vsub.f32 %v981, %v984
  %v987 = vld [vmem:[%s7] sm:$0x1]
  %v988 = vadd.f32 %v986, 1e-05
  %v989 = vrsqrt.pop %v988
  %v992 = vunpack.c.l.s4 1966171168
  %v993 = vunpack.c.0.s8 %v992
  %v994 = vlaneseq
  %v995 = vshrl.u32 %v994, 7
  %v996 = vsub.s32 %v993, %v995
  %v997 = vrot.slane %v989, %v996
  %v998 = vcombine.high %v997, %v997
  %v1000 = vunpack.c.l.s4 1966171168
  %v1001 = vunpack.c.0.s8 %v1000
  %v1002 = vlaneseq
  %v1003 = vshrl.u32 %v1002, 7
  %v1004 = vsub.s32 %v1001, %v1003
  %v1005 = vrot.slane %v998, %v1004
  %v1007 = vmul.f32 %v987, %v1005
  %v1008 = vld [vmem:[%s8] sm:$0x1]
  %v1009 = vmul.f32 %v981, %v1007
  %v1010 = vsub.f32 %v1008, %v1009
  %v1012 = vlaneseq
  %v1013 = vshrl.u32 %v1012, 7
  %v1014 = vsub.s32 0, %v1013
  %v1015 = vrot.slane %v1007, %v1014
  %v1017 = vmul.f32 %v748, %v1015
  %v1019 = vlaneseq
  %v1020 = vshrl.u32 %v1019, 7
  %v1021 = vsub.s32 0, %v1020
  %v1022 = vrot.slane %v1010, %v1021
  %v1024 = vadd.f32 %v1017, %v1022
  %v1025 = vmul.f32 %v1024, 0.2
  %v1026 = vmax.f32 %v1024, %v1025
  %v1027 = vmul.f32 %v850, %v1015
  %v1028 = vadd.f32 %v1027, %v1022
  %v1029 = vmul.f32 %v1028, 0.2
  %v1030 = vmax.f32 %v1028, %v1029
  %1031 = vst.msk [vmem:[#allocation3] sm:$0x3f] %vm855, %v1026
  %1032 = vst.msk [vmem:[#allocation3 + $0x6] sm:$0x3f] %vm855, %v1030
  %v1033 = vld [vmem:[#allocation3] sm:$0xf]
  %v1034 = vld [vmem:[#allocation3 + $0x1] sm:$0xf]
  %v1035 = vld [vmem:[#allocation3 + $0x2] sm:$0xf]
  %1037 = vrot.lane.b32.xlu0 %v1034, 96
  %v1038 = vpop.permute.xlu0 %1037
  %1041 = vrot.lane.b32.xlu0 %v1035, 64
  %v1042 = vpop.permute.xlu0 %1041
  %v1044 = vsel %vm496, %v1033, %v1038
  %v1045 = vsel %vm67, %v1038, %v1042
  %v1046 = vpack.c.bf16 %v1044, %v1044
  %v1047 = vpack.c.bf16 %v1045, %v1045
  %v1048 = vpack.c.bf16 %v1042, %v1042
  %v1049 = vld [vmem:[%s9] sm:$0xf]
  %v1050 = vld [vmem:[%s9 + $0x4] sm:$0xf]
  %v1051 = vld [vmem:[%s9 + $0x8] sm:$0xf]
  %v1052 = vld [vmem:[%s9 + $0xc] sm:$0xf]
  %v1053 = vld [vmem:[%s9 + $0x10] sm:$0xf]
  %v1054 = vld [vmem:[%s9 + $0x14] sm:$0xf]
  %v1055 = vld [vmem:[%s9 + $0x18] sm:$0xf]
  %v1056 = vld [vmem:[%s9 + $0x1c] sm:$0xf]
  %v1057 = vld [vmem:[%s9 + $0x20] sm:$0xf]
  %v1058 = vld [vmem:[%s9 + $0x24] sm:$0xf]
  %v1059 = vld [vmem:[%s9 + $0x28] sm:$0xf]
  %v1060 = vld [vmem:[%s9 + $0x2c] sm:$0xf]
  %v1061 = vld [vmem:[%s9 + $0x30] sm:$0xf]
  %v1062 = vld [vmem:[%s9 + $0x34] sm:$0xf]
  %v1063 = vld [vmem:[%s9 + $0x38] sm:$0xf]
  %v1064 = vld [vmem:[%s9 + $0x3c] sm:$0xf]
  %v1065 = vld [vmem:[%s9 + $0x40] sm:$0xf]
  %v1066 = vld [vmem:[%s9 + $0x44] sm:$0xf]
  %v1067 = vld [vmem:[%s9 + $0x48] sm:$0xf]
  %v1068 = vld [vmem:[%s9 + $0x4c] sm:$0xf]
  %v1069 = vld [vmem:[%s9 + $0x50] sm:$0xf]
  %v1070 = vld [vmem:[%s9 + $0x54] sm:$0xf]
  %v1071 = vld [vmem:[%s9 + $0x58] sm:$0xf]
  %v1072 = vld [vmem:[%s9 + $0x5c] sm:$0xf]
  %v1073 = vld [vmem:[%s9 + $0x60] sm:$0xf]
  %v1074 = vld [vmem:[%s9 + $0x64] sm:$0xf]
  %v1075 = vld [vmem:[%s9 + $0x68] sm:$0xf]
  %v1076 = vld [vmem:[%s9 + $0x6c] sm:$0xf]
  %v1077 = vld [vmem:[%s9 + $0x70] sm:$0xf]
  %v1078 = vld [vmem:[%s9 + $0x74] sm:$0xf]
  %v1079 = vld [vmem:[%s9 + $0x78] sm:$0xf]
  %v1080 = vld [vmem:[%s9 + $0x7c] sm:$0xf]
  %v1081 = vld [vmem:[%s9 + $0x80] sm:$0xf]
  %v1082 = vld [vmem:[%s9 + $0x84] sm:$0xf]
  %v1083 = vld [vmem:[%s9 + $0x88] sm:$0xf]
  %v1084 = vld [vmem:[%s9 + $0x8c] sm:$0xf]
  %v1121 = vunpack.c.l.b16 %v1049
  %v1122 = vunpack.c.l.b16 %v1050
  %v1123 = vunpack.c.l.b16 %v1051
  %v1124 = vunpack.c.l.b16 %v1052
  %v1125 = vunpack.c.l.b16 %v1053
  %v1126 = vunpack.c.l.b16 %v1054
  %v1127 = vunpack.c.l.b16 %v1055
  %v1128 = vunpack.c.l.b16 %v1056
  %v1129 = vunpack.c.l.b16 %v1057
  %v1130 = vunpack.c.l.b16 %v1058
  %v1131 = vunpack.c.l.b16 %v1059
  %v1132 = vunpack.c.l.b16 %v1060
  %v1133 = vunpack.c.l.b16 %v1061
  %v1134 = vunpack.c.l.b16 %v1062
  %v1135 = vunpack.c.l.b16 %v1063
  %v1136 = vunpack.c.l.b16 %v1064
  %v1137 = vunpack.c.l.b16 %v1065
  %v1138 = vunpack.c.l.b16 %v1066
  %v1139 = vunpack.c.l.b16 %v1067
  %v1140 = vunpack.c.l.b16 %v1068
  %v1141 = vunpack.c.l.b16 %v1069
  %v1142 = vunpack.c.l.b16 %v1070
  %v1143 = vunpack.c.l.b16 %v1071
  %v1144 = vunpack.c.l.b16 %v1072
  %v1145 = vunpack.c.l.b16 %v1073
  %v1146 = vunpack.c.l.b16 %v1074
  %v1147 = vunpack.c.l.b16 %v1075
  %v1148 = vunpack.c.l.b16 %v1076
  %v1149 = vunpack.c.l.b16 %v1077
  %v1150 = vunpack.c.l.b16 %v1078
  %v1151 = vunpack.c.l.b16 %v1079
  %v1152 = vunpack.c.l.b16 %v1080
  %v1153 = vunpack.c.l.b16 %v1081
  %v1154 = vunpack.c.l.b16 %v1082
  %v1155 = vunpack.c.l.b16 %v1083
  %v1156 = vunpack.c.l.b16 %v1084
  %v1157 = vpack.c.b16 %v1122, %v1121
  %v1158 = vpack.c.b16 %v1124, %v1123
  %v1159 = vpack.c.b16 %v1126, %v1125
  %v1160 = vpack.c.b16 %v1128, %v1127
  %v1161 = vpack.c.b16 %v1130, %v1129
  %v1162 = vpack.c.b16 %v1132, %v1131
  %v1163 = vpack.c.b16 %v1134, %v1133
  %v1164 = vpack.c.b16 %v1136, %v1135
  %v1165 = vpack.c.b16 %v1138, %v1137
  %v1166 = vpack.c.b16 %v1140, %v1139
  %v1167 = vpack.c.b16 %v1142, %v1141
  %v1168 = vpack.c.b16 %v1144, %v1143
  %v1169 = vpack.c.b16 %v1146, %v1145
  %v1170 = vpack.c.b16 %v1148, %v1147
  %v1171 = vpack.c.b16 %v1150, %v1149
  %v1172 = vpack.c.b16 %v1152, %v1151
  %v1173 = vpack.c.b16 %v1154, %v1153
  %v1174 = vpack.c.b16 %v1156, %v1155
  %vm1193 = vcmask 261120
  %v1195 = vsel %vm1193, %v1048, 0
  %1197 = vmatprep.subr.bf16.mxu0 0
  %1198 = vmatpush1.bf16.msra.mxu0 %v1157
  %1199 = vmatprep.subr.bf16.mxu0 0
  %1200 = vmatpush1.bf16.msra.mxu0 %v1158
  %1201 = vmatprep.subr.bf16.mxu0 0
  %1202 = vmatpush1.bf16.msra.mxu0 %v1159
  %1203 = vmatprep.subr.bf16.mxu0 0
  %1204 = vmatpush1.bf16.msra.mxu0 %v1160
  %1205 = vmatprep.subr.bf16.mxu0 0
  %1206 = vmatpush1.bf16.msra.mxu0 %v1161
  %1207 = vmatprep.subr.bf16.mxu0 0
  %1208 = vmatpush1.bf16.msra.mxu0 %v1162
  %1209 = vmatprep.subr.bf16.mxu0 0
  %1210 = vmatpush1.bf16.msra.mxu0 %v1163
  %1211 = vmatprep.subr.bf16.mxu0 0
  %1212 = vmatpush1.bf16.msra.mxu0 %v1164
  %1213 = vmatprep.subr.bf16.mxu0 0
  %1214 = vmatpush1.bf16.msra.mxu0 %v1165
  %1215 = vmatprep.subr.bf16.mxu0 0
  %1216 = vmatpush1.bf16.msra.mxu0 %v1166
  %1217 = vmatprep.subr.bf16.mxu0 0
  %1218 = vmatpush1.bf16.msra.mxu0 %v1167
  %1219 = vmatprep.subr.bf16.mxu0 0
  %1220 = vmatpush1.bf16.msra.mxu0 %v1168
  %1221 = vmatprep.subr.bf16.mxu0 0
  %1222 = vmatpush1.bf16.msra.mxu0 %v1169
  %1223 = vmatprep.subr.bf16.mxu0 0
  %1224 = vmatpush1.bf16.msra.mxu0 %v1170
  %1225 = vmatprep.subr.bf16.mxu0 0
  %1226 = vmatpush1.bf16.msra.mxu0 %v1171
  %1227 = vmatprep.subr.bf16.mxu0 0
  %1228 = vmatpush1.bf16.msra.mxu0 %v1172
  %1229 = vmatprep.mubr.bf16.mxu0 %v1047
  %1230 = vmatmul.mubr.bf16.gmra.mrb[0].mxu0 %v1046
  %v1231 = vpop.f32.mrb[0].mxu0
  %v1232 = vadd.f32 0.0, %v1231
  %v1233 = vpop.f32.mrb[0].mxu0
  %v1234 = vpop.f32.mrb[0].mxu0
  %v1235 = vpop.f32.mrb[0].mxu0
  %1236 = vdwg.mxu0
  %1237 = vmatprep.subr.bf16.mxu0 0
  %1238 = vmatpush1.bf16.msra.mxu0 %v1173
  %1239 = vmatprep.subr.bf16.mxu0 0
  %1240 = vmatpush1.bf16.msra.mxu0 %v1174
  %1241 = vmatprep.subr.bf16.mxu0 0
  %1242 = vmatpush1.bf16.msra.mxu0 0
  %1243 = vmatprep.subr.bf16.mxu0 0
  %1244 = vmatpush1.bf16.msra.mxu0 0
  %1245 = vmatprep.subr.bf16.mxu0 0
  %1246 = vmatpush1.bf16.msra.mxu0 0
  %1247 = vmatprep.subr.bf16.mxu0 0
  %1248 = vmatpush1.bf16.msra.mxu0 0
  %1249 = vmatprep.subr.bf16.mxu0 0
  %1250 = vmatpush1.bf16.msra.mxu0 0
  %1251 = vmatprep.subr.bf16.mxu0 0
  %1252 = vmatpush1.bf16.msra.mxu0 0
  %1253 = vmatprep.subr.bf16.mxu0 0
  %1254 = vmatpush1.bf16.msra.mxu0 0
  %1255 = vmatprep.subr.bf16.mxu0 0
  %1256 = vmatpush1.bf16.msra.mxu0 0
  %1257 = vmatprep.subr.bf16.mxu0 0
  %1258 = vmatpush1.bf16.msra.mxu0 0
  %1259 = vmatprep.subr.bf16.mxu0 0
  %1260 = vmatpush1.bf16.msra.mxu0 0
  %1261 = vmatprep.subr.bf16.mxu0 0
  %1262 = vmatpush1.bf16.msra.mxu0 0
  %1263 = vmatprep.subr.bf16.mxu0 0
  %1264 = vmatpush1.bf16.msra.mxu0 0
  %1265 = vmatprep.subr.bf16.mxu0 0
  %1266 = vmatpush1.bf16.msra.mxu0 0
  %1267 = vmatprep.subr.bf16.mxu0 0
  %1268 = vmatpush1.bf16.msra.mxu0 0
  %1269 = vmatprep.mubr.bf16.mxu0 0
  %1270 = vmatmul.mubr.bf16.gmra.mrb[0].mxu0 %v1195
  %v1271 = vpop.f32.mrb[0].mxu0
  %v1272 = vadd.f32 %v1232, %v1271
  %v1273 = vpop.f32.mrb[0].mxu0
  %v1274 = vpop.f32.mrb[0].mxu0
  %v1275 = vpop.f32.mrb[0].mxu0
  %1276 = vdwg.mxu0
  %v1277 = vld [vmem:[#allocation3 + $0x6] sm:$0xf]
  %v1278 = vld [vmem:[#allocation3 + $0x7] sm:$0xf]
  %v1279 = vld [vmem:[#allocation3 + $0x8] sm:$0xf]
  %1281 = vrot.lane.b32.xlu0 %v1278, 96
  %v1282 = vpop.permute.xlu0 %1281
  %1285 = vrot.lane.b32.xlu0 %v1279, 64
  %v1286 = vpop.permute.xlu0 %1285
  %v1288 = vsel %vm496, %v1277, %v1282
  %v1289 = vsel %vm67, %v1282, %v1286
  %v1290 = vpack.c.bf16 %v1288, %v1288
  %v1291 = vpack.c.bf16 %v1289, %v1289
  %v1292 = vpack.c.bf16 %v1286, %v1286
  %v1294 = vsel %vm1193, %v1292, 0
  %1296 = vmatprep.subr.bf16.mxu0 0
  %1297 = vmatpush1.bf16.msra.mxu0 %v1157
  %1298 = vmatprep.subr.bf16.mxu0 0
  %1299 = vmatpush1.bf16.msra.mxu0 %v1158
  %1300 = vmatprep.subr.bf16.mxu0 0
  %1301 = vmatpush1.bf16.msra.mxu0 %v1159
  %1302 = vmatprep.subr.bf16.mxu0 0
  %1303 = vmatpush1.bf16.msra.mxu0 %v1160
  %1304 = vmatprep.subr.bf16.mxu0 0
  %1305 = vmatpush1.bf16.msra.mxu0 %v1161
  %1306 = vmatprep.subr.bf16.mxu0 0
  %1307 = vmatpush1.bf16.msra.mxu0 %v1162
  %1308 = vmatprep.subr.bf16.mxu0 0
  %1309 = vmatpush1.bf16.msra.mxu0 %v1163
  %1310 = vmatprep.subr.bf16.mxu0 0
  %1311 = vmatpush1.bf16.msra.mxu0 %v1164
  %1312 = vmatprep.subr.bf16.mxu0 0
  %1313 = vmatpush1.bf16.msra.mxu0 %v1165
  %1314 = vmatprep.subr.bf16.mxu0 0
  %1315 = vmatpush1.bf16.msra.mxu0 %v1166
  %1316 = vmatprep.subr.bf16.mxu0 0
  %1317 = vmatpush1.bf16.msra.mxu0 %v1167
  %1318 = vmatprep.subr.bf16.mxu0 0
  %1319 = vmatpush1.bf16.msra.mxu0 %v1168
  %1320 = vmatprep.subr.bf16.mxu0 0
  %1321 = vmatpush1.bf16.msra.mxu0 %v1169
  %1322 = vmatprep.subr.bf16.mxu0 0
  %1323 = vmatpush1.bf16.msra.mxu0 %v1170
  %1324 = vmatprep.subr.bf16.mxu0 0
  %1325 = vmatpush1.bf16.msra.mxu0 %v1171
  %1326 = vmatprep.subr.bf16.mxu0 0
  %1327 = vmatpush1.bf16.msra.mxu0 %v1172
  %1328 = vmatprep.mubr.bf16.mxu0 %v1291
  %1329 = vmatmul.mubr.bf16.gmra.mrb[0].mxu0 %v1290
  %v1330 = vpop.f32.mrb[0].mxu0
  %v1331 = vadd.f32 0.0, %v1330
  %v1332 = vpop.f32.mrb[0].mxu0
  %v1333 = vpop.f32.mrb[0].mxu0
  %v1334 = vpop.f32.mrb[0].mxu0
  %1335 = vdwg.mxu0
  %1336 = vmatprep.subr.bf16.mxu0 0
  %1337 = vmatpush1.bf16.msra.mxu0 %v1173
  %1338 = vmatprep.subr.bf16.mxu0 0
  %1339 = vmatpush1.bf16.msra.mxu0 %v1174
  %1340 = vmatprep.subr.bf16.mxu0 0
  %1341 = vmatpush1.bf16.msra.mxu0 0
  %1342 = vmatprep.subr.bf16.mxu0 0
  %1343 = vmatpush1.bf16.msra.mxu0 0
  %1344 = vmatprep.subr.bf16.mxu0 0
  %1345 = vmatpush1.bf16.msra.mxu0 0
  %1346 = vmatprep.subr.bf16.mxu0 0
  %1347 = vmatpush1.bf16.msra.mxu0 0
  %1348 = vmatprep.subr.bf16.mxu0 0
  %1349 = vmatpush1.bf16.msra.mxu0 0
  %1350 = vmatprep.subr.bf16.mxu0 0
  %1351 = vmatpush1.bf16.msra.mxu0 0
  %1352 = vmatprep.subr.bf16.mxu0 0
  %1353 = vmatpush1.bf16.msra.mxu0 0
  %1354 = vmatprep.subr.bf16.mxu0 0
  %1355 = vmatpush1.bf16.msra.mxu0 0
  %1356 = vmatprep.subr.bf16.mxu0 0
  %1357 = vmatpush1.bf16.msra.mxu0 0
  %1358 = vmatprep.subr.bf16.mxu0 0
  %1359 = vmatpush1.bf16.msra.mxu0 0
  %1360 = vmatprep.subr.bf16.mxu0 0
  %1361 = vmatpush1.bf16.msra.mxu0 0
  %1362 = vmatprep.subr.bf16.mxu0 0
  %1363 = vmatpush1.bf16.msra.mxu0 0
  %1364 = vmatprep.subr.bf16.mxu0 0
  %1365 = vmatpush1.bf16.msra.mxu0 0
  %1366 = vmatprep.subr.bf16.mxu0 0
  %1367 = vmatpush1.bf16.msra.mxu0 0
  %1368 = vmatprep.mubr.bf16.mxu0 0
  %1369 = vmatmul.mubr.bf16.gmra.mrb[0].mxu0 %v1294
  %v1370 = vpop.f32.mrb[0].mxu0
  %v1371 = vadd.f32 %v1331, %v1370
  %v1372 = vpop.f32.mrb[0].mxu0
  %v1373 = vpop.f32.mrb[0].mxu0
  %v1374 = vpop.f32.mrb[0].mxu0
  %1375 = vdwg.mxu0
  %vm1376 = vcmask 257024
  %v1377 = vsel %vm1376, %v1272, 0.0
  %v1378 = vrot.slane %v1377, 4
  %v1379 = vadd.f32 %v1377, %v1378
  %v1380 = vrot.slane %v1379, 2
  %v1381 = vadd.f32 %v1379, %v1380
  %v1382 = vrot.slane %v1381, 1
  %v1383 = vadd.f32 %v1381, %v1382
  %v1384 = vmul.f32 %v1272, %v1272
  %v1385 = vsel %vm1376, %v1384, 0.0
  %v1386 = vrot.slane %v1385, 4
  %v1387 = vadd.f32 %v1385, %v1386
  %v1388 = vrot.slane %v1387, 2
  %v1389 = vadd.f32 %v1387, %v1388
  %v1390 = vrot.slane %v1389, 1
  %v1391 = vadd.f32 %v1389, %v1390
  %v1392 = vsel %vm1376, %v1371, 0.0
  %v1393 = vrot.slane %v1392, 4
  %v1394 = vadd.f32 %v1392, %v1393
  %v1395 = vrot.slane %v1394, 2
  %v1396 = vadd.f32 %v1394, %v1395
  %v1397 = vrot.slane %v1396, 1
  %v1398 = vadd.f32 %v1396, %v1397
  %v1399 = vmul.f32 %v1371, %v1371
  %v1400 = vsel %vm1376, %v1399, 0.0
  %v1401 = vrot.slane %v1400, 4
  %v1402 = vadd.f32 %v1400, %v1401
  %v1403 = vrot.slane %v1402, 2
  %v1404 = vadd.f32 %v1402, %v1403
  %v1405 = vrot.slane %v1404, 1
  %v1406 = vadd.f32 %v1404, %v1405
  %v1407 = vadd.f32 %v1383, %v1398
  %v1408 = vadd.f32 %v1391, %v1406
  %v1409 = vsel %vm318, %v1407, %v1408
  %v1410 = vpack.c.bf16 %v1409, %v1409
  %v1411 = vld [vmem:[%s10] sm:$0xf]
  %v1412 = vld [vmem:[%s10 + $0x4] sm:$0xf]
  %v1413 = vld [vmem:[%s10 + $0x8] sm:$0xf]
  %v1414 = vld [vmem:[%s10 + $0xc] sm:$0xf]
  %v1419 = vunpack.c.l.b16 %v1411
  %v1420 = vunpack.c.l.b16 %v1412
  %v1421 = vunpack.c.l.b16 %v1413
  %v1422 = vunpack.c.l.b16 %v1414
  %v1423 = vpack.c.b16 %v1420, %v1419
  %v1424 = vpack.c.b16 %v1422, %v1421
  %v1428 = vsel %vm1193, %v1410, 0
  %1430 = vmatprep.subr.bf16.mxu0 0
  %1431 = vmatpush1.bf16.msra.mxu0 %v1423
  %1432 = vmatprep.subr.bf16.mxu0 0
  %1433 = vmatpush1.bf16.msra.mxu0 %v1424
  %1434 = vmatprep.subr.bf16.mxu0 0
  %1435 = vmatpush1.bf16.msra.mxu0 0
  %1436 = vmatprep.subr.bf16.mxu0 0
  %1437 = vmatpush1.bf16.msra.mxu0 0
  %1438 = vmatprep.subr.bf16.mxu0 0
  %1439 = vmatpush1.bf16.msra.mxu0 0
  %1440 = vmatprep.subr.bf16.mxu0 0
  %1441 = vmatpush1.bf16.msra.mxu0 0
  %1442 = vmatprep.subr.bf16.mxu0 0
  %1443 = vmatpush1.bf16.msra.mxu0 0
  %1444 = vmatprep.subr.bf16.mxu0 0
  %1445 = vmatpush1.bf16.msra.mxu0 0
  %1446 = vmatprep.subr.bf16.mxu0 0
  %1447 = vmatpush1.bf16.msra.mxu0 0
  %1448 = vmatprep.subr.bf16.mxu0 0
  %1449 = vmatpush1.bf16.msra.mxu0 0
  %1450 = vmatprep.subr.bf16.mxu0 0
  %1451 = vmatpush1.bf16.msra.mxu0 0
  %1452 = vmatprep.subr.bf16.mxu0 0
  %1453 = vmatpush1.bf16.msra.mxu0 0
  %1454 = vmatprep.subr.bf16.mxu0 0
  %1455 = vmatpush1.bf16.msra.mxu0 0
  %1456 = vmatprep.subr.bf16.mxu0 0
  %1457 = vmatpush1.bf16.msra.mxu0 0
  %1458 = vmatprep.subr.bf16.mxu0 0
  %1459 = vmatpush1.bf16.msra.mxu0 0
  %1460 = vmatprep.subr.bf16.mxu0 0
  %1461 = vmatpush1.bf16.msra.mxu0 0
  %1462 = vmatprep.mubr.bf16.mxu0 0
  %1463 = vmatmul.mubr.bf16.gmra.mrb[0].mxu0 %v1428
  %v1464 = vpop.f32.mrb[0].mxu0
  %v1465 = vadd.f32 0.0, %v1464
  %v1466 = vpop.f32.mrb[0].mxu0
  %v1467 = vpop.f32.mrb[0].mxu0
  %v1468 = vpop.f32.mrb[0].mxu0
  %1469 = vdwg.mxu0
  %v1470 = vmul.f32 %v1465, 0.03125
  %v1471 = vmul.f32 %v1470, %v1470
  %v1473 = vrot.slane %v1471, 7
  %v1475 = vsub.f32 %v1470, %v1473
  %v1476 = vld [vmem:[%s11] sm:$0x1]
  %v1477 = vadd.f32 %v1475, 1e-05
  %v1478 = vrsqrt.pop %v1477
  %v1481 = vunpack.c.l.s4 1966171168
  %v1482 = vunpack.c.0.s8 %v1481
  %v1483 = vlaneseq
  %v1484 = vshrl.u32 %v1483, 7
  %v1485 = vsub.s32 %v1482, %v1484
  %v1486 = vrot.slane %v1478, %v1485
  %v1487 = vcombine.high %v1486, %v1486
  %v1489 = vunpack.c.l.s4 1966171168
  %v1490 = vunpack.c.0.s8 %v1489
  %v1491 = vlaneseq
  %v1492 = vshrl.u32 %v1491, 7
  %v1493 = vsub.s32 %v1490, %v1492
  %v1494 = vrot.slane %v1487, %v1493
  %v1496 = vmul.f32 %v1476, %v1494
  %v1497 = vld [vmem:[%s12] sm:$0x1]
  %v1498 = vmul.f32 %v1470, %v1496
  %v1499 = vsub.f32 %v1497, %v1498
  %v1501 = vlaneseq
  %v1502 = vshrl.u32 %v1501, 7
  %v1503 = vsub.s32 0, %v1502
  %v1504 = vrot.slane %v1496, %v1503
  %v1506 = vmul.f32 %v1272, %v1504
  %v1508 = vlaneseq
  %v1509 = vshrl.u32 %v1508, 7
  %v1510 = vsub.s32 0, %v1509
  %v1511 = vrot.slane %v1499, %v1510
  %v1513 = vadd.f32 %v1506, %v1511
  %v1514 = vmul.f32 %v1513, 0.2
  %v1515 = vmax.f32 %v1513, %v1514
  %v1516 = vmul.f32 %v1371, %v1504
  %v1517 = vadd.f32 %v1516, %v1511
  %v1518 = vmul.f32 %v1517, 0.2
  %v1519 = vmax.f32 %v1517, %v1518
  %v1520 = vld [vmem:[%s13] sm:$0xf]
  %v1521 = vmul.f32 %v1515, %v1520
  %v1522 = vsel %vm1376, %v1521, 0.0
  %v1523 = vrot.slane %v1522, 4
  %v1524 = vadd.f32 %v1522, %v1523
  %v1525 = vrot.slane %v1524, 2
  %v1526 = vadd.f32 %v1524, %v1525
  %v1527 = vrot.slane %v1526, 1
  %v1528 = vadd.f32 %v1526, %v1527
  %v1529 = vmul.f32 %v1519, %v1520
  %v1530 = vsel %vm1376, %v1529, 0.0
  %v1531 = vrot.slane %v1530, 4
  %v1532 = vadd.f32 %v1530, %v1531
  %v1533 = vrot.slane %v1532, 2
  %v1534 = vadd.f32 %v1532, %v1533
  %v1535 = vrot.slane %v1534, 1
  %v1536 = vadd.f32 %v1534, %v1535
  %v1537 = vsel %vm318, %v1528, %v1536
  %vm1538 = vcmask 254976
  %v1539 = vsel %vm1538, %v1537, 0.0
  %1540 = vadd.xlane.f32.xlu0 %v1539
  %v1541 = vpop.xlane.xlu0 %1540
  %v1542 = vld [vmem:[#allocation4] sm:$0x1]
  %v1544 = vlaneseq
  %v1545 = vshrl.u32 %v1544, 7
  %v1546 = vsub.s32 0, %v1545
  %v1547 = vrot.slane %v1542, %v1546
  %v1549 = vadd.f32 %v1541, %v1547
  %v1550 = vsub.f32 0.0, %v1549
  %v1551 = vmul.f32 %v1550, 1.442695
  %v1552 = vpow.pop %v1551
  %v1553 = vadd.f32 %v1552, 1.0
  %v1554 = vrcp.pop %v1553
  %v1555 = vmul.f32 1.0, %v1554
  %vm1556 = vcmask 1024
  %1557 = vst.msk [vmem:[%s15] sm:$0x3] %vm1556, %v1555
  // Predicated region
  $region62: #{discriminator_forward.1} parent=0 // pred_check
    _
  $region63: #{discriminator_forward.1} parent=0 // pred_check_branch
    %1559 = sbr.rel (0) target = $region65
  $region64: #{discriminator_forward.1} parent=0 // pred_region
    _
  $region65: #{discriminator_forward.1} parent=0 // pred_fallthru
    _
  // Predicated region
  $region66: #{discriminator_forward.1} parent=0 // pred_check
    _
  $region67: #{discriminator_forward.1} parent=0 // pred_check_branch
    %1561 = sbr.rel (0) target = $region69
  $region68: #{discriminator_forward.1} parent=0 // pred_region
    _
  $region69: #{discriminator_forward.1} parent=0 // pred_fallthru
    _

</llo_original>
